<compile_context>
chip_gen: v6e
topology: v6e:2x2x1
jax: 0.10.0
libtpu: 0.0.40
codegen_flags: <defaults>
</compile_context>

<pallas_src>
import functools

import jax
import jax.numpy as jnp
from jax import lax
from jax.experimental import pallas as pl
from jax.experimental.pallas import tpu as pltpu


# ----------------------------------------------------------------------------
# Row-tiled linear:  y = x @ W + b
# ----------------------------------------------------------------------------
def _linear_kernel(x_ref, w_ref, b_ref, o_ref):
    acc = jnp.dot(x_ref[...], w_ref[...], preferred_element_type=jnp.float32)
    o_ref[...] = (acc + b_ref[...]).astype(o_ref.dtype)


def _pick_row_tile(m, cin, cout, budget_bytes=24 << 20, cap=512):
    """Largest row tile keeping double-buffered tiles + resident weights < budget
    (budget chosen for the v7x 32 MiB scoped / 64 MiB physical VMEM)."""
    bytes_per = 4  # f32
    weight_bytes = bytes_per * (cin * cout + cout) * 2      # resident, double-buffered
    per_row = bytes_per * (cin + cout) * 2                  # x tile + out tile, 2-deep
    max_rows = max(8, (budget_bytes - weight_bytes) // per_row)
    tm = int(min(m, cap, max_rows))
    if tm >= m:
        return m
    tm = max(8, (tm // 8) * 8)
    for t in range(tm, 7, -8):        # prefer a divisor of m so the last block is full
        if m % t == 0:
            return t
    return tm


def linear(x2d, w, b):
    m, cin = x2d.shape
    cout = w.shape[1]
    tm = _pick_row_tile(m, cin, cout)
    cost = pl.CostEstimate(
        flops=2 * m * cin * cout,
        transcendentals=0,
        bytes_accessed=4 * (m * cin + cin * cout + m * cout),
    )
    return pl.pallas_call(
        _linear_kernel,
        out_shape=jax.ShapeDtypeStruct((m, cout), x2d.dtype),
        grid=(pl.cdiv(m, tm),),
        in_specs=[
            pl.BlockSpec((tm, cin), lambda i: (i, 0)),
            pl.BlockSpec((cin, cout), lambda i: (0, 0)),   # weights stay VMEM-resident
            pl.BlockSpec((1, cout), lambda i: (0, 0)),
        ],
        out_specs=pl.BlockSpec((tm, cout), lambda i: (i, 0)),
        compiler_params=pltpu.CompilerParams(
            dimension_semantics=("parallel",)),
        cost_estimate=cost,
    )(x2d, w, b.reshape(1, cout))


# ----------------------------------------------------------------------------
# Attention: one grid step per batch, all heads per step, layout kept (B, N, C)
# ----------------------------------------------------------------------------
def _attn_kernel(q_ref, kv_ref, o_ref, *, num_heads, head_dim):
    # q_ref: (1, N, C), kv_ref: (1, M, 2C) = [k | v], o_ref: (1, N, C).
    # The attention scale is already folded into the q projection weights.
    C = num_heads * head_dim
    outs = []
    for h in range(num_heads):                       # static unroll (H is small)
        lo, hi = h * head_dim, (h + 1) * head_dim
        q = q_ref[0, :, lo:hi].astype(jnp.float32)           # (N, D)
        k = kv_ref[0, :, lo:hi].astype(jnp.float32)          # (M, D)
        v = kv_ref[0, :, C + lo:C + hi].astype(jnp.float32)  # (M, D)

        # contract on the last axis of both q and k -> no explicit k transpose
        s = lax.dot_general(q, k, (((1,), (1,)), ((), ())),
                            preferred_element_type=jnp.float32)  # (N, M)
        s = s - jnp.max(s, axis=-1, keepdims=True)               # stable softmax
        p = jnp.exp(s)
        l = jnp.sum(p, axis=-1, keepdims=True)                   # (N, 1)
        o = jnp.dot(p, v, preferred_element_type=jnp.float32)    # (N, D)
        # normalize the (N, D) output, not the (N, M) probabilities; EUP reciprocal
        outs.append(o * pl.reciprocal(l, approx=True))
    # lane-dense full-tile store in (B, N, H*D) channel order (== torch layout)
    o_ref[0] = jnp.concatenate(outs, axis=-1).astype(o_ref.dtype)


def attention(q, kv, *, num_heads, head_dim):
    B, N, C = q.shape
    M = kv.shape[1]
    cost = pl.CostEstimate(
        flops=4 * B * num_heads * N * M * head_dim,
        transcendentals=B * num_heads * N * M,
        bytes_accessed=4 * (q.size + kv.size + q.size),
    )
    return pl.pallas_call(
        functools.partial(_attn_kernel, num_heads=num_heads, head_dim=head_dim),
        out_shape=jax.ShapeDtypeStruct((B, N, C), q.dtype),
        grid=(B,),
        in_specs=[
            pl.BlockSpec((1, N, C), lambda b: (b, 0, 0)),
            pl.BlockSpec((1, M, 2 * C), lambda b: (b, 0, 0)),
        ],
        out_specs=pl.BlockSpec((1, N, C), lambda b: (b, 0, 0)),
        compiler_params=pltpu.CompilerParams(
            dimension_semantics=("parallel",)),
        cost_estimate=cost,
    )(q, kv)


# ----------------------------------------------------------------------------
# Module forward
# ----------------------------------------------------------------------------
def efficient_attention_forward(x, params, *, num_heads, head_dim, sr_ratio):
    B, N, C = x.shape
    scale = head_dim ** (-0.5)

    # ---- trace-time weight folding (O(C^2), runs once under jit) ------------
    # attention scale folded into the q projection
    q_w = params["q_w"] * scale
    q_b = params["q_b"] * scale

    k_w, k_b = params["k_w"], params["k_b"]
    v_w, v_b = params["v_w"], params["v_b"]
    if sr_ratio > 1:
        # eval-mode BatchNorm1d: y = x*a + c, folded into the k/v projections.
        # TODO(synk): training-mode batch statistics / running-stat updates are
        # not modeled (eval-mode running stats only).
        eps = 1e-5
        a = params["bn_gamma"] * lax.rsqrt(params["bn_var"] + eps)   # (C,)
        c = params["bn_beta"] - params["bn_mean"] * a                # (C,)
        k_b = k_b + c @ k_w
        v_b = v_b + c @ v_w
        k_w = a[:, None] * k_w
        v_w = a[:, None] * v_w
    # fused k|v projection: one matmul against a (C, 2C) weight
    kv_w = jnp.concatenate([k_w, v_w], axis=1)
    kv_b = jnp.concatenate([k_b, v_b], axis=0)

    # ---- q projection (layout stays (B, N, C); head split happens in-kernel) -
    q = linear(x.reshape(B * N, C), q_w, q_b).reshape(B, N, C)

    # ---- spatial reduction of the k/v stream ---------------------------------
    if sr_ratio > 1:
        n_ratio = sr_ratio ** 2
        Np = (N // n_ratio) * n_ratio        # AvgPool1d truncates trailing tokens
        xk = x[:, :Np].reshape(B, Np // n_ratio, n_ratio, C).mean(axis=2)
    else:
        xk = x
    M = xk.shape[1]

    # ---- fused k|v projection (BN already folded into the weights) ----------
    kv = linear(xk.reshape(B * M, C), kv_w, kv_b).reshape(B, M, 2 * C)

    # ---- scaled dot-product attention (attn_drop p=0 -> identity) -----------
    o = attention(q, kv, num_heads=num_heads, head_dim=head_dim)   # (B, N, C)

    # ---- output projection (proj_drop p=0 -> identity) ----------------------
    out_dim = params["proj_w"].shape[1]
    out = linear(o.reshape(B * N, C), params["proj_w"], params["proj_b"])
    return out.reshape(B, N, out_dim)


# ----------------------------------------------------------------------------
# Deterministic parameter init + driver
# ----------------------------------------------------------------------------
def init_params(key, dim, out_dim):
    ks = jax.random.split(key, 8)
    s = 0.05
    # weights stored as (in_features, out_features) for direct x @ W
    return {
        "q_w": jax.random.normal(ks[0], (dim, dim), jnp.float32) * s,
        "q_b": jax.random.normal(ks[1], (dim,), jnp.float32) * s,
        "k_w": jax.random.normal(ks[2], (dim, dim), jnp.float32) * s,
        "k_b": jax.random.normal(ks[3], (dim,), jnp.float32) * s,
        "v_w": jax.random.normal(ks[4], (dim, dim), jnp.float32) * s,
        "v_b": jax.random.normal(ks[5], (dim,), jnp.float32) * s,
        "proj_w": jax.random.normal(ks[6], (dim, out_dim), jnp.float32) * s,
        "proj_b": jax.random.normal(ks[7], (out_dim,), jnp.float32) * s,
        # BatchNorm1d(dim) default init (eval-mode running stats)
        "bn_gamma": jnp.ones((dim,), jnp.float32),
        "bn_beta": jnp.zeros((dim,), jnp.float32),
        "bn_mean": jnp.zeros((dim,), jnp.float32),
        "bn_var": jnp.ones((dim,), jnp.float32),
    }


if __name__ == "__main__":
    # small config: dim=64, head_dim=32 -> num_heads=2, seq N=64, sr_ratio=2 (M=16)
    B, N, dim = 2, 64, 64
    head_dim = 32
    num_heads = dim // head_dim
    sr_ratio = 2

    key = jax.random.PRNGKey(0)
    kx, kp = jax.random.split(key)
    x = jax.random.normal(kx, (B, N, dim), jnp.float32)
    params = init_params(kp, dim, dim)

    fwd = jax.jit(functools.partial(
        efficient_attention_forward,
        num_heads=num_heads, head_dim=head_dim, sr_ratio=sr_ratio))
    out = fwd(x, params)
    jax.block_until_ready(out)
    assert out.shape == (B, N, dim), out.shape
    print("KERNEL_OK")
</pallas_src>

<mosaic_0001>
module attributes {stable_mosaic.version = 11 : i64} {
  func.func @_linear_kernel(%arg0: i32, %arg1: memref<32x64xf32, #tpu.memory_space<vmem>>, %arg2: memref<64x128xf32, #tpu.memory_space<vmem>>, %arg3: memref<1x128xf32, #tpu.memory_space<vmem>>, %arg4: memref<32x128xf32, #tpu.memory_space<vmem>>) attributes {dimension_semantics = [#tpu.dimension_semantics<parallel>], iteration_bounds = array<i64: 1>, scalar_prefetch = 0 : i64, scratch_operands = 0 : i64, tpu.core_type = #tpu.core_type<tc>, window_params = [{transform_indices = @transform_0, window_bounds = array<i64: 32, 64>}, {pipeline_mode = #tpu.pipeline_mode<synchronous>, transform_indices = @transform_1, window_bounds = array<i64: 64, 128>}, {pipeline_mode = #tpu.pipeline_mode<synchronous>, transform_indices = @transform_2, window_bounds = array<i64: 1, 128>}, {transform_indices = @transform_3, window_bounds = array<i64: 32, 128>}]} {
    %c0 = arith.constant 0 : index
    %c0_0 = arith.constant 0 : index
    %0 = vector.load %arg1[%c0, %c0_0] : memref<32x64xf32, #tpu.memory_space<vmem>>, vector<32x64xf32>
    %c0_1 = arith.constant 0 : index
    %c0_2 = arith.constant 0 : index
    %1 = vector.load %arg2[%c0_1, %c0_2] : memref<64x128xf32, #tpu.memory_space<vmem>>, vector<64x128xf32>
    %cst = arith.constant dense<0.000000e+00> : vector<32x128xf32>
    %2 = tpu.matmul %0, %1, %cst {dimension_numbers = #tpu.dot_dimension_numbers<[1], [0], [0], [1], [0, 0, 1, 1], [], []>} : vector<32x64xf32>, vector<64x128xf32>, vector<32x128xf32> -> vector<32x128xf32>
    %c0_3 = arith.constant 0 : index
    %c0_4 = arith.constant 0 : index
    %3 = vector.load %arg3[%c0_3, %c0_4] : memref<1x128xf32, #tpu.memory_space<vmem>>, vector<1x128xf32>
    %4 = vector.broadcast %3 : vector<1x128xf32> to vector<32x128xf32>
    %5 = arith.addf %2, %4 : vector<32x128xf32>
    %c0_5 = arith.constant 0 : index
    %c0_6 = arith.constant 0 : index
    %6 = vector.load %arg4[%c0_5, %c0_6] : memref<32x128xf32, #tpu.memory_space<vmem>>, vector<32x128xf32>
    tpu.vector_store %arg4[%c0_5, %c0_6], %5 {strides = array<i32>} : memref<32x128xf32, #tpu.memory_space<vmem>>, vector<32x128xf32>,
    return
  }
  func.func @transform_0(%arg0: i32) -> (i32, i32) {
    %c0_i32 = arith.constant 0 : i32
    %c0_i32_0 = arith.constant 0 : i32
    return %arg0, %c0_i32 : i32, i32
  }
  func.func @transform_1(%arg0: i32) -> (i32, i32) {
    %c0_i32 = arith.constant 0 : i32
    %c0_i32_0 = arith.constant 0 : i32
    %c0_i32_1 = arith.constant 0 : i32
    return %c0_i32, %c0_i32_0 : i32, i32
  }
  func.func @transform_2(%arg0: i32) -> (i32, i32) {
    %c0_i32 = arith.constant 0 : i32
    %c0_i32_0 = arith.constant 0 : i32
    %c0_i32_1 = arith.constant 0 : i32
    return %c0_i32, %c0_i32_0 : i32, i32
  }
  func.func @transform_3(%arg0: i32) -> (i32, i32) {
    %c0_i32 = arith.constant 0 : i32
    %c0_i32_0 = arith.constant 0 : i32
    return %arg0, %c0_i32 : i32, i32
  }
}

module attributes {stable_mosaic.version = 11 : i64} {
  func.func @_linear_kernel(%arg0: i32, %arg1: memref<128x64xf32, #tpu.memory_space<vmem>>, %arg2: memref<64x64xf32, #tpu.memory_space<vmem>>, %arg3: memref<1x64xf32, #tpu.memory_space<vmem>>, %arg4: memref<128x64xf32, #tpu.memory_space<vmem>>) attributes {dimension_semantics = [#tpu.dimension_semantics<parallel>], iteration_bounds = array<i64: 1>, scalar_prefetch = 0 : i64, scratch_operands = 0 : i64, tpu.core_type = #tpu.core_type<tc>, window_params = [{transform_indices = @transform_0, window_bounds = array<i64: 128, 64>}, {pipeline_mode = #tpu.pipeline_mode<synchronous>, transform_indices = @transform_1, window_bounds = array<i64: 64, 64>}, {pipeline_mode = #tpu.pipeline_mode<synchronous>, transform_indices = @transform_2, window_bounds = array<i64: 1, 64>}, {transform_indices = @transform_3, window_bounds = array<i64: 128, 64>}]} {
    %c0 = arith.constant 0 : index
    %c0_0 = arith.constant 0 : index
    %0 = vector.load %arg1[%c0, %c0_0] : memref<128x64xf32, #tpu.memory_space<vmem>>, vector<128x64xf32>
    %c0_1 = arith.constant 0 : index
    %c0_2 = arith.constant 0 : index
    %1 = vector.load %arg2[%c0_1, %c0_2] : memref<64x64xf32, #tpu.memory_space<vmem>>, vector<64x64xf32>
    %cst = arith.constant dense<0.000000e+00> : vector<128x64xf32>
    %2 = tpu.matmul %0, %1, %cst {dimension_numbers = #tpu.dot_dimension_numbers<[1], [0], [0], [1], [0, 0, 1, 1], [], []>} : vector<128x64xf32>, vector<64x64xf32>, vector<128x64xf32> -> vector<128x64xf32>
    %c0_3 = arith.constant 0 : index
    %c0_4 = arith.constant 0 : index
    %3 = vector.load %arg3[%c0_3, %c0_4] : memref<1x64xf32, #tpu.memory_space<vmem>>, vector<1x64xf32>
    %4 = vector.broadcast %3 : vector<1x64xf32> to vector<128x64xf32>
    %5 = arith.addf %2, %4 : vector<128x64xf32>
    %c0_5 = arith.constant 0 : index
    %c0_6 = arith.constant 0 : index
    %6 = vector.load %arg4[%c0_5, %c0_6] : memref<128x64xf32, #tpu.memory_space<vmem>>, vector<128x64xf32>
    tpu.vector_store %arg4[%c0_5, %c0_6], %5 {strides = array<i32>} : memref<128x64xf32, #tpu.memory_space<vmem>>, vector<128x64xf32>,
    return
  }
  func.func @transform_0(%arg0: i32) -> (i32, i32) {
    %c0_i32 = arith.constant 0 : i32
    %c0_i32_0 = arith.constant 0 : i32
    return %arg0, %c0_i32 : i32, i32
  }
  func.func @transform_1(%arg0: i32) -> (i32, i32) {
    %c0_i32 = arith.constant 0 : i32
    %c0_i32_0 = arith.constant 0 : i32
    %c0_i32_1 = arith.constant 0 : i32
    return %c0_i32, %c0_i32_0 : i32, i32
  }
  func.func @transform_2(%arg0: i32) -> (i32, i32) {
    %c0_i32 = arith.constant 0 : i32
    %c0_i32_0 = arith.constant 0 : i32
    %c0_i32_1 = arith.constant 0 : i32
    return %c0_i32, %c0_i32_0 : i32, i32
  }
  func.func @transform_3(%arg0: i32) -> (i32, i32) {
    %c0_i32 = arith.constant 0 : i32
    %c0_i32_0 = arith.constant 0 : i32
    return %arg0, %c0_i32 : i32, i32
  }
}

module attributes {stable_mosaic.version = 11 : i64} {
  func.func @_attn_kernel(%arg0: i32, %arg1: memref<1x64x64xf32, #tpu.memory_space<vmem>>, %arg2: memref<1x16x128xf32, #tpu.memory_space<vmem>>, %arg3: memref<1x64x64xf32, #tpu.memory_space<vmem>>) attributes {dimension_semantics = [#tpu.dimension_semantics<parallel>], iteration_bounds = array<i64: 2>, scalar_prefetch = 0 : i64, scratch_operands = 0 : i64, tpu.core_type = #tpu.core_type<tc>, window_params = [{transform_indices = @transform_0, window_bounds = array<i64: 1, 64, 64>}, {transform_indices = @transform_1, window_bounds = array<i64: 1, 16, 128>}, {transform_indices = @transform_2, window_bounds = array<i64: 1, 64, 64>}]} {
    %c0 = arith.constant 0 : index
    %c0_0 = arith.constant 0 : index
    %c0_1 = arith.constant 0 : index
    %0 = vector.load %arg1[%c0, %c0_0, %c0_1] : memref<1x64x64xf32, #tpu.memory_space<vmem>>, vector<1x64x32xf32>
    %1 = vector.shape_cast %0 : vector<1x64x32xf32> to vector<64x32xf32>
    %c0_2 = arith.constant 0 : index
    %c0_3 = arith.constant 0 : index
    %c0_4 = arith.constant 0 : index
    %2 = vector.load %arg2[%c0_2, %c0_3, %c0_4] : memref<1x16x128xf32, #tpu.memory_space<vmem>>, vector<1x16x32xf32>
    %3 = vector.shape_cast %2 : vector<1x16x32xf32> to vector<16x32xf32>
    %c0_5 = arith.constant 0 : index
    %c0_6 = arith.constant 0 : index
    %c64 = arith.constant 64 : index
    %4 = vector.load %arg2[%c0_5, %c0_6, %c64] : memref<1x16x128xf32, #tpu.memory_space<vmem>>, vector<1x16x32xf32>
    %5 = vector.shape_cast %4 : vector<1x16x32xf32> to vector<16x32xf32>
    %cst = arith.constant dense<0.000000e+00> : vector<64x16xf32>
    %6 = tpu.matmul %1, %3, %cst {dimension_numbers = #tpu.dot_dimension_numbers<[1], [1], [0], [0], [0, 0, 1, 0], [], []>} : vector<64x32xf32>, vector<16x32xf32>, vector<64x16xf32> -> vector<64x16xf32>
    %cst_7 = arith.constant dense<0xFF800000> : vector<64xf32>
    %7 = vector.multi_reduction <maximumf>, %6, %cst_7 [1] : vector<64x16xf32> to vector<64xf32>
    %8 = vector.shape_cast %7 : vector<64xf32> to vector<64x1xf32>
    %9 = vector.broadcast %8 : vector<64x1xf32> to vector<64x16xf32>
    %10 = arith.subf %6, %9 : vector<64x16xf32>
    %11 = math.exp %10 : vector<64x16xf32>
    %cst_8 = arith.constant dense<0.000000e+00> : vector<64xf32>
    %12 = vector.multi_reduction <add>, %11, %cst_8 [1] : vector<64x16xf32> to vector<64xf32>
    %13 = vector.shape_cast %12 : vector<64xf32> to vector<64x1xf32>
    %cst_9 = arith.constant dense<0.000000e+00> : vector<64x32xf32>
    %14 = tpu.matmul %11, %5, %cst_9 {dimension_numbers = #tpu.dot_dimension_numbers<[1], [0], [0], [1], [0, 0, 1, 1], [], []>} : vector<64x16xf32>, vector<16x32xf32>, vector<64x32xf32> -> vector<64x32xf32>
    %15 = tpu.reciprocal %13 {approx = true} : vector<64x1xf32> -> vector<64x1xf32>
    %16 = vector.broadcast %15 : vector<64x1xf32> to vector<64x32xf32>
    %17 = arith.mulf %14, %16 : vector<64x32xf32>
    %c0_10 = arith.constant 0 : index
    %c0_11 = arith.constant 0 : index
    %c32 = arith.constant 32 : index
    %18 = vector.load %arg1[%c0_10, %c0_11, %c32] : memref<1x64x64xf32, #tpu.memory_space<vmem>>, vector<1x64x32xf32>
    %19 = vector.shape_cast %18 : vector<1x64x32xf32> to vector<64x32xf32>
    %c0_12 = arith.constant 0 : index
    %c0_13 = arith.constant 0 : index
    %c32_14 = arith.constant 32 : index
    %20 = vector.load %arg2[%c0_12, %c0_13, %c32_14] : memref<1x16x128xf32, #tpu.memory_space<vmem>>, vector<1x16x32xf32>
    %21 = vector.shape_cast %20 : vector<1x16x32xf32> to vector<16x32xf32>
    %c0_15 = arith.constant 0 : index
    %c0_16 = arith.constant 0 : index
    %c96 = arith.constant 96 : index
    %22 = vector.load %arg2[%c0_15, %c0_16, %c96] : memref<1x16x128xf32, #tpu.memory_space<vmem>>, vector<1x16x32xf32>
    %23 = vector.shape_cast %22 : vector<1x16x32xf32> to vector<16x32xf32>
    %cst_17 = arith.constant dense<0.000000e+00> : vector<64x16xf32>
    %24 = tpu.matmul %19, %21, %cst_17 {dimension_numbers = #tpu.dot_dimension_numbers<[1], [1], [0], [0], [0, 0, 1, 0], [], []>} : vector<64x32xf32>, vector<16x32xf32>, vector<64x16xf32> -> vector<64x16xf32>
    %cst_18 = arith.constant dense<0xFF800000> : vector<64xf32>
    %25 = vector.multi_reduction <maximumf>, %24, %cst_18 [1] : vector<64x16xf32> to vector<64xf32>
    %26 = vector.shape_cast %25 : vector<64xf32> to vector<64x1xf32>
    %27 = vector.broadcast %26 : vector<64x1xf32> to vector<64x16xf32>
    %28 = arith.subf %24, %27 : vector<64x16xf32>
    %29 = math.exp %28 : vector<64x16xf32>
    %cst_19 = arith.constant dense<0.000000e+00> : vector<64xf32>
    %30 = vector.multi_reduction <add>, %29, %cst_19 [1] : vector<64x16xf32> to vector<64xf32>
    %31 = vector.shape_cast %30 : vector<64xf32> to vector<64x1xf32>
    %cst_20 = arith.constant dense<0.000000e+00> : vector<64x32xf32>
    %32 = tpu.matmul %29, %23, %cst_20 {dimension_numbers = #tpu.dot_dimension_numbers<[1], [0], [0], [1], [0, 0, 1, 1], [], []>} : vector<64x16xf32>, vector<16x32xf32>, vector<64x32xf32> -> vector<64x32xf32>
    %33 = tpu.reciprocal %31 {approx = true} : vector<64x1xf32> -> vector<64x1xf32>
    %34 = vector.broadcast %33 : vector<64x1xf32> to vector<64x32xf32>
    %35 = arith.mulf %32, %34 : vector<64x32xf32>
    %36 = tpu.concatenate %17, %35 in 1 : vector<64x32xf32>, vector<64x32xf32> -> vector<64x64xf32>
    %c0_21 = arith.constant 0 : index
    %c0_22 = arith.constant 0 : index
    %c0_23 = arith.constant 0 : index
    %37 = vector.load %arg3[%c0_21, %c0_22, %c0_23] : memref<1x64x64xf32, #tpu.memory_space<vmem>>, vector<1x64x64xf32>
    %38 = vector.shape_cast %37 : vector<1x64x64xf32> to vector<64x64xf32>
    %39 = vector.shape_cast %36 : vector<64x64xf32> to vector<1x64x64xf32>
    tpu.vector_store %arg3[%c0_21, %c0_22, %c0_23], %39 {strides = array<i32>} : memref<1x64x64xf32, #tpu.memory_space<vmem>>, vector<1x64x64xf32>,
    return
  }
  func.func @transform_0(%arg0: i32) -> (i32, i32, i32) {
    %c0_i32 = arith.constant 0 : i32
    %c0_i32_0 = arith.constant 0 : i32
    %c0_i32_1 = arith.constant 0 : i32
    return %arg0, %c0_i32, %c0_i32_0 : i32, i32, i32
  }
  func.func @transform_1(%arg0: i32) -> (i32, i32, i32) {
    %c0_i32 = arith.constant 0 : i32
    %c0_i32_0 = arith.constant 0 : i32
    %c0_i32_1 = arith.constant 0 : i32
    return %arg0, %c0_i32, %c0_i32_0 : i32, i32, i32
  }
  func.func @transform_2(%arg0: i32) -> (i32, i32, i32) {
    %c0_i32 = arith.constant 0 : i32
    %c0_i32_0 = arith.constant 0 : i32
    %c0_i32_1 = arith.constant 0 : i32
    return %arg0, %c0_i32, %c0_i32_0 : i32, i32, i32
  }
}

module attributes {stable_mosaic.version = 11 : i64} {
  func.func @_linear_kernel(%arg0: i32, %arg1: memref<128x64xf32, #tpu.memory_space<vmem>>, %arg2: memref<64x64xf32, #tpu.memory_space<vmem>>, %arg3: memref<1x64xf32, #tpu.memory_space<vmem>>, %arg4: memref<128x64xf32, #tpu.memory_space<vmem>>) attributes {dimension_semantics = [#tpu.dimension_semantics<parallel>], iteration_bounds = array<i64: 1>, scalar_prefetch = 0 : i64, scratch_operands = 0 : i64, tpu.core_type = #tpu.core_type<tc>, window_params = [{transform_indices = @transform_0, window_bounds = array<i64: 128, 64>}, {pipeline_mode = #tpu.pipeline_mode<synchronous>, transform_indices = @transform_1, window_bounds = array<i64: 64, 64>}, {pipeline_mode = #tpu.pipeline_mode<synchronous>, transform_indices = @transform_2, window_bounds = array<i64: 1, 64>}, {transform_indices = @transform_3, window_bounds = array<i64: 128, 64>}]} {
    %c0 = arith.constant 0 : index
    %c0_0 = arith.constant 0 : index
    %0 = vector.load %arg1[%c0, %c0_0] : memref<128x64xf32, #tpu.memory_space<vmem>>, vector<128x64xf32>
    %c0_1 = arith.constant 0 : index
    %c0_2 = arith.constant 0 : index
    %1 = vector.load %arg2[%c0_1, %c0_2] : memref<64x64xf32, #tpu.memory_space<vmem>>, vector<64x64xf32>
    %cst = arith.constant dense<0.000000e+00> : vector<128x64xf32>
    %2 = tpu.matmul %0, %1, %cst {dimension_numbers = #tpu.dot_dimension_numbers<[1], [0], [0], [1], [0, 0, 1, 1], [], []>} : vector<128x64xf32>, vector<64x64xf32>, vector<128x64xf32> -> vector<128x64xf32>
    %c0_3 = arith.constant 0 : index
    %c0_4 = arith.constant 0 : index
    %3 = vector.load %arg3[%c0_3, %c0_4] : memref<1x64xf32, #tpu.memory_space<vmem>>, vector<1x64xf32>
    %4 = vector.broadcast %3 : vector<1x64xf32> to vector<128x64xf32>
    %5 = arith.addf %2, %4 : vector<128x64xf32>
    %c0_5 = arith.constant 0 : index
    %c0_6 = arith.constant 0 : index
    %6 = vector.load %arg4[%c0_5, %c0_6] : memref<128x64xf32, #tpu.memory_space<vmem>>, vector<128x64xf32>
    tpu.vector_store %arg4[%c0_5, %c0_6], %5 {strides = array<i32>} : memref<128x64xf32, #tpu.memory_space<vmem>>, vector<128x64xf32>,
    return
  }
  func.func @transform_0(%arg0: i32) -> (i32, i32) {
    %c0_i32 = arith.constant 0 : i32
    %c0_i32_0 = arith.constant 0 : i32
    return %arg0, %c0_i32 : i32, i32
  }
  func.func @transform_1(%arg0: i32) -> (i32, i32) {
    %c0_i32 = arith.constant 0 : i32
    %c0_i32_0 = arith.constant 0 : i32
    %c0_i32_1 = arith.constant 0 : i32
    return %c0_i32, %c0_i32_0 : i32, i32
  }
  func.func @transform_2(%arg0: i32) -> (i32, i32) {
    %c0_i32 = arith.constant 0 : i32
    %c0_i32_0 = arith.constant 0 : i32
    %c0_i32_1 = arith.constant 0 : i32
    return %c0_i32, %c0_i32_0 : i32, i32
  }
  func.func @transform_3(%arg0: i32) -> (i32, i32) {
    %c0_i32 = arith.constant 0 : i32
    %c0_i32_0 = arith.constant 0 : i32
    return %arg0, %c0_i32 : i32, i32
  }
}

</mosaic_0001>

<llo_original>
// kernel: efficient_attention_forward.5
$region0: #{efficient_attention_forward.5}
  #allocation0 [shape = 'u32[]', space=smem, size = 0x4, offset = 0x4, fixed_abs, tag = 'smem constant byte address 0x4 - core index']
  #allocation1 [shape = 'u32[144,128]{1,0:T(1,128)}', space=vmem, size = 0x12000, scoped, tag = 'internal scratch']
  %s0 = inlined_call_operand.vmem [shape: f32[32,64], index: 0, kind: input, shape index: {}]
  %s1 = inlined_call_operand.vmem [shape: f32[64,128], index: 1, kind: input, shape index: {}]
  %s2 = inlined_call_operand.vmem [shape: f32[1,128], index: 2, kind: input, shape index: {}]
  %s3 = inlined_call_operand.vmem [shape: f32[32,128], index: 3, kind: output, shape index: {}]
  %s4 = sld [smem:[#allocation0]]
  $region22: #{efficient_attention_forward.5} parent=0
    _
  %s6 = ssub.s32 1, %s4
  %s7 = scalar_select 0, %s6, %s4
  // Predicated region
  $region2: #{efficient_attention_forward.5} parent=0 // pred_check
    _
  $region3: #{efficient_attention_forward.5} parent=0 // pred_check_branch
    %9 = sbr.rel (0) target = $region5
  $region4: #{efficient_attention_forward.5} parent=0 // pred_region
    _
  $region5: #{efficient_attention_forward.5} parent=0 // pred_fallthru
    _
  // Predicated region
  $region6: #{efficient_attention_forward.5} parent=0 // pred_check
    _
  $region7: #{efficient_attention_forward.5} parent=0 // pred_check_branch
    %11 = sbr.rel (0) target = $region9
  $region8: #{efficient_attention_forward.5} parent=0 // pred_region
    _
  $region9: #{efficient_attention_forward.5} parent=0 // pred_fallthru
    _
  // Predicated region
  $region10: #{efficient_attention_forward.5} parent=0 // pred_check
    _
  $region11: #{efficient_attention_forward.5} parent=0 // pred_check_branch
    %13 = sbr.rel (0) target = $region13
  $region12: #{efficient_attention_forward.5} parent=0 // pred_region
    _
  $region13: #{efficient_attention_forward.5} parent=0 // pred_fallthru
    _
  %v14 = vld [vmem:[%s0] sm:$0xff]
  %v15 = vld [vmem:[%s0 + $0x8] sm:$0xff]
  %v16 = vld [vmem:[%s0 + $0x10] sm:$0xff]
  %v17 = vld [vmem:[%s0 + $0x18] sm:$0xff]
  %v18 = vld [vmem:[%s1] sm:$0xff]
  %v19 = vld [vmem:[%s1 + $0x8] sm:$0xff]
  %v20 = vld [vmem:[%s1 + $0x10] sm:$0xff]
  %v21 = vld [vmem:[%s1 + $0x18] sm:$0xff]
  %v22 = vld [vmem:[%s1 + $0x20] sm:$0xff]
  %v23 = vld [vmem:[%s1 + $0x28] sm:$0xff]
  %v24 = vld [vmem:[%s1 + $0x30] sm:$0xff]
  %v25 = vld [vmem:[%s1 + $0x38] sm:$0xff]
  %v26 = vld [vmem:[%s2] sm:$0x1]
  %v28 = vlaneseq
  %v29 = vshrl.u32 %v28, 7
  %v30 = vsub.s32 0, %v29
  %v31 = vrot.slane %v26, %v30
  %vm33 = vcmask 523264
  %v35 = vsel %vm33, %v14, 0
  %v38 = vsel %vm33, %v15, 0
  %v41 = vsel %vm33, %v16, 0
  %v44 = vsel %vm33, %v17, 0
  %46 = vmatprep.subr.mxu0 0.0
  %47 = vmatpush1.msra.mxu0 0.0
  %48 = vmatprep.subr.mxu0 0.0
  %49 = vmatpush1.msra.mxu0 0.0
  %50 = vmatprep.subr.mxu0 0.0
  %51 = vmatpush1.msra.mxu0 0.0
  %52 = vmatprep.subr.mxu0 0.0
  %53 = vmatpush1.msra.mxu0 0.0
  %54 = vmatprep.subr.mxu0 0.0
  %55 = vmatpush1.msra.mxu0 0.0
  %56 = vmatprep.subr.mxu0 0.0
  %57 = vmatpush1.msra.mxu0 0.0
  %58 = vmatprep.subr.mxu0 0.0
  %59 = vmatpush1.msra.mxu0 0.0
  %60 = vmatprep.subr.mxu0 0.0
  %61 = vmatpush1.msra.mxu0 0.0
  %62 = vmatprep.subr.mxu0 0.0
  %63 = vmatpush1.msra.mxu0 %v25
  %64 = vmatprep.subr.mxu0 0.0
  %65 = vmatpush1.msra.mxu0 %v24
  %66 = vmatprep.subr.mxu0 0.0
  %67 = vmatpush1.msra.mxu0 %v23
  %68 = vmatprep.subr.mxu0 0.0
  %69 = vmatpush1.msra.mxu0 %v22
  %70 = vmatprep.subr.mxu0 0.0
  %71 = vmatpush1.msra.mxu0 %v21
  %72 = vmatprep.subr.mxu0 0.0
  %73 = vmatpush1.msra.mxu0 %v20
  %74 = vmatprep.subr.mxu0 0.0
  %75 = vmatpush1.msra.mxu0 %v19
  %76 = vmatprep.subr.mxu0 0.0
  %77 = vmatpush1.msra.mxu0 %v18
  %78 = vmatprep.subr.mxu0 0.0
  %79 = vmatpush2.msra.mxu0 0.0
  %80 = vmatprep.subr.mxu0 0.0
  %81 = vmatpush2.msra.mxu0 0.0
  %82 = vmatprep.subr.mxu0 0.0
  %83 = vmatpush2.msra.mxu0 0.0
  %84 = vmatprep.subr.mxu0 0.0
  %85 = vmatpush2.msra.mxu0 0.0
  %86 = vmatprep.subr.mxu0 0.0
  %87 = vmatpush2.msra.mxu0 0.0
  %88 = vmatprep.subr.mxu0 0.0
  %89 = vmatpush2.msra.mxu0 0.0
  %90 = vmatprep.subr.mxu0 0.0
  %91 = vmatpush2.msra.mxu0 0.0
  %92 = vmatprep.subr.mxu0 0.0
  %93 = vmatpush2.msra.mxu0 0.0
  %94 = vmatprep.subr.mxu0 0.0
  %95 = vmatpush2.msra.mxu0 0.0
  %96 = vmatprep.subr.mxu0 0.0
  %97 = vmatpush2.msra.mxu0 0.0
  %98 = vmatprep.subr.mxu0 0.0
  %99 = vmatpush2.msra.mxu0 0.0
  %100 = vmatprep.subr.mxu0 0.0
  %101 = vmatpush2.msra.mxu0 0.0
  %102 = vmatprep.subr.mxu0 0.0
  %103 = vmatpush2.msra.mxu0 0.0
  %104 = vmatprep.subr.mxu0 0.0
  %105 = vmatpush2.msra.mxu0 0.0
  %106 = vmatprep.subr.mxu0 0.0
  %107 = vmatpush2.msra.mxu0 0.0
  %108 = vmatprep.subr.mxu0 0.0
  %109 = vmatpush2.msra.mxu0 0.0
  %110 = vmatprep.mubr.f32.mxu0 0.0
  %111 = vmatmul.mubr.f32.gmra.mxu0 %v35
  %v112 = vpop.f32.mrf.mxu0
  %v113 = vadd.f32 %v31, %v112
  %v114 = vpop.f32.mrf.mxu0
  %115 = vmatprep.mubr.f32.mxu0 0.0
  %116 = vmatmul.mubr.f32.gmra.mxu0 %v38
  %v117 = vpop.f32.mrf.mxu0
  %v118 = vadd.f32 %v31, %v117
  %v119 = vpop.f32.mrf.mxu0
  %120 = vmatprep.mubr.f32.mxu0 0.0
  %121 = vmatmul.mubr.f32.gmra.mxu0 %v41
  %v122 = vpop.f32.mrf.mxu0
  %v123 = vadd.f32 %v31, %v122
  %v124 = vpop.f32.mrf.mxu0
  %125 = vmatprep.mubr.f32.mxu0 0.0
  %126 = vmatmul.mubr.f32.gmra.mxu0 %v44
  %v127 = vpop.f32.mrf.mxu0
  %v128 = vadd.f32 %v31, %v127
  %v129 = vpop.f32.mrf.mxu0
  %130 = vdwg.mxu0
  %131 = vst [vmem:[%s3] sm:$0xff] %v113
  %132 = vst [vmem:[%s3 + $0x8] sm:$0xff] %v118
  %133 = vst [vmem:[%s3 + $0x10] sm:$0xff] %v123
  %134 = vst [vmem:[%s3 + $0x18] sm:$0xff] %v128
  // Predicated region
  $region14: #{efficient_attention_forward.5} parent=0 // pred_check
    _
  $region15: #{efficient_attention_forward.5} parent=0 // pred_check_branch
    %136 = sbr.rel (0) target = $region17
  $region16: #{efficient_attention_forward.5} parent=0 // pred_region
    _
  $region17: #{efficient_attention_forward.5} parent=0 // pred_fallthru
    _
  // Predicated region
  $region18: #{efficient_attention_forward.5} parent=0 // pred_check
    _
  $region19: #{efficient_attention_forward.5} parent=0 // pred_check_branch
    %138 = sbr.rel (0) target = $region21
  $region20: #{efficient_attention_forward.5} parent=0 // pred_region
    _
  $region21: #{efficient_attention_forward.5} parent=0 // pred_fallthru
    _

// kernel: efficient_attention_forward.4
$region0: #{efficient_attention_forward.4}
  #allocation0 [shape = 'u32[]', space=smem, size = 0x4, offset = 0x4, fixed_abs, tag = 'smem constant byte address 0x4 - core index']
  #allocation1 [shape = 'u32[144,128]{1,0:T(1,128)}', space=vmem, size = 0x12000, scoped, tag = 'internal scratch']
  %s0 = inlined_call_operand.vmem [shape: f32[128,64], index: 0, kind: input, shape index: {}]
  %s1 = inlined_call_operand.vmem [shape: f32[64,64], index: 1, kind: input, shape index: {}]
  %s2 = inlined_call_operand.vmem [shape: f32[1,64], index: 2, kind: input, shape index: {}]
  %s3 = inlined_call_operand.vmem [shape: f32[128,64], index: 3, kind: output, shape index: {}]
  %s4 = sld [smem:[#allocation0]]
  $region22: #{efficient_attention_forward.4} parent=0
    _
  %s6 = ssub.s32 1, %s4
  %s7 = scalar_select 0, %s6, %s4
  // Predicated region
  $region2: #{efficient_attention_forward.4} parent=0 // pred_check
    _
  $region3: #{efficient_attention_forward.4} parent=0 // pred_check_branch
    %9 = sbr.rel (0) target = $region5
  $region4: #{efficient_attention_forward.4} parent=0 // pred_region
    _
  $region5: #{efficient_attention_forward.4} parent=0 // pred_fallthru
    _
  // Predicated region
  $region6: #{efficient_attention_forward.4} parent=0 // pred_check
    _
  $region7: #{efficient_attention_forward.4} parent=0 // pred_check_branch
    %11 = sbr.rel (0) target = $region9
  $region8: #{efficient_attention_forward.4} parent=0 // pred_region
    _
  $region9: #{efficient_attention_forward.4} parent=0 // pred_fallthru
    _
  // Predicated region
  $region10: #{efficient_attention_forward.4} parent=0 // pred_check
    _
  $region11: #{efficient_attention_forward.4} parent=0 // pred_check_branch
    %13 = sbr.rel (0) target = $region13
  $region12: #{efficient_attention_forward.4} parent=0 // pred_region
    _
  $region13: #{efficient_attention_forward.4} parent=0 // pred_fallthru
    _
  %v14 = vld [vmem:[%s0] sm:$0xff]
  %v15 = vld [vmem:[%s0 + $0x8] sm:$0xff]
  %v16 = vld [vmem:[%s0 + $0x10] sm:$0xff]
  %v17 = vld [vmem:[%s0 + $0x18] sm:$0xff]
  %v18 = vld [vmem:[%s0 + $0x20] sm:$0xff]
  %v19 = vld [vmem:[%s0 + $0x28] sm:$0xff]
  %v20 = vld [vmem:[%s0 + $0x30] sm:$0xff]
  %v21 = vld [vmem:[%s0 + $0x38] sm:$0xff]
  %v22 = vld [vmem:[%s0 + $0x40] sm:$0xff]
  %v23 = vld [vmem:[%s0 + $0x48] sm:$0xff]
  %v24 = vld [vmem:[%s0 + $0x50] sm:$0xff]
  %v25 = vld [vmem:[%s0 + $0x58] sm:$0xff]
  %v26 = vld [vmem:[%s0 + $0x60] sm:$0xff]
  %v27 = vld [vmem:[%s0 + $0x68] sm:$0xff]
  %v28 = vld [vmem:[%s0 + $0x70] sm:$0xff]
  %v29 = vld [vmem:[%s0 + $0x78] sm:$0xff]
  %v30 = vld [vmem:[%s1] sm:$0xff]
  %v31 = vld [vmem:[%s1 + $0x8] sm:$0xff]
  %v32 = vld [vmem:[%s1 + $0x10] sm:$0xff]
  %v33 = vld [vmem:[%s1 + $0x18] sm:$0xff]
  %v34 = vld [vmem:[%s1 + $0x20] sm:$0xff]
  %v35 = vld [vmem:[%s1 + $0x28] sm:$0xff]
  %v36 = vld [vmem:[%s1 + $0x30] sm:$0xff]
  %v37 = vld [vmem:[%s1 + $0x38] sm:$0xff]
  %v38 = vld [vmem:[%s2] sm:$0x1]
  %v40 = vlaneseq
  %v41 = vshrl.u32 %v40, 7
  %v42 = vsub.s32 0, %v41
  %v43 = vrot.slane %v38, %v42
  %vm45 = vcmask 523264
  %v47 = vsel %vm45, %v14, 0
  %v50 = vsel %vm45, %v15, 0
  %v53 = vsel %vm45, %v16, 0
  %v56 = vsel %vm45, %v17, 0
  %v59 = vsel %vm45, %v18, 0
  %v62 = vsel %vm45, %v19, 0
  %v65 = vsel %vm45, %v20, 0
  %v68 = vsel %vm45, %v21, 0
  %v71 = vsel %vm45, %v22, 0
  %v74 = vsel %vm45, %v23, 0
  %v77 = vsel %vm45, %v24, 0
  %v80 = vsel %vm45, %v25, 0
  %v83 = vsel %vm45, %v26, 0
  %v86 = vsel %vm45, %v27, 0
  %v89 = vsel %vm45, %v28, 0
  %v92 = vsel %vm45, %v29, 0
  %94 = vmatprep.subr.mxu0 0.0
  %95 = vmatpush1.msra.mxu0 0.0
  %96 = vmatprep.subr.mxu0 0.0
  %97 = vmatpush1.msra.mxu0 0.0
  %98 = vmatprep.subr.mxu0 0.0
  %99 = vmatpush1.msra.mxu0 0.0
  %100 = vmatprep.subr.mxu0 0.0
  %101 = vmatpush1.msra.mxu0 0.0
  %102 = vmatprep.subr.mxu0 0.0
  %103 = vmatpush1.msra.mxu0 0.0
  %104 = vmatprep.subr.mxu0 0.0
  %105 = vmatpush1.msra.mxu0 0.0
  %106 = vmatprep.subr.mxu0 0.0
  %107 = vmatpush1.msra.mxu0 0.0
  %108 = vmatprep.subr.mxu0 0.0
  %109 = vmatpush1.msra.mxu0 0.0
  %110 = vmatprep.subr.mxu0 0.0
  %111 = vmatpush1.msra.mxu0 %v37
  %112 = vmatprep.subr.mxu0 0.0
  %113 = vmatpush1.msra.mxu0 %v36
  %114 = vmatprep.subr.mxu0 0.0
  %115 = vmatpush1.msra.mxu0 %v35
  %116 = vmatprep.subr.mxu0 0.0
  %117 = vmatpush1.msra.mxu0 %v34
  %118 = vmatprep.subr.mxu0 0.0
  %119 = vmatpush1.msra.mxu0 %v33
  %120 = vmatprep.subr.mxu0 0.0
  %121 = vmatpush1.msra.mxu0 %v32
  %122 = vmatprep.subr.mxu0 0.0
  %123 = vmatpush1.msra.mxu0 %v31
  %124 = vmatprep.subr.mxu0 0.0
  %125 = vmatpush1.msra.mxu0 %v30
  %126 = vmatprep.subr.mxu0 0.0
  %127 = vmatpush2.msra.mxu0 0.0
  %128 = vmatprep.subr.mxu0 0.0
  %129 = vmatpush2.msra.mxu0 0.0
  %130 = vmatprep.subr.mxu0 0.0
  %131 = vmatpush2.msra.mxu0 0.0
  %132 = vmatprep.subr.mxu0 0.0
  %133 = vmatpush2.msra.mxu0 0.0
  %134 = vmatprep.subr.mxu0 0.0
  %135 = vmatpush2.msra.mxu0 0.0
  %136 = vmatprep.subr.mxu0 0.0
  %137 = vmatpush2.msra.mxu0 0.0
  %138 = vmatprep.subr.mxu0 0.0
  %139 = vmatpush2.msra.mxu0 0.0
  %140 = vmatprep.subr.mxu0 0.0
  %141 = vmatpush2.msra.mxu0 0.0
  %142 = vmatprep.subr.mxu0 0.0
  %143 = vmatpush2.msra.mxu0 0.0
  %144 = vmatprep.subr.mxu0 0.0
  %145 = vmatpush2.msra.mxu0 0.0
  %146 = vmatprep.subr.mxu0 0.0
  %147 = vmatpush2.msra.mxu0 0.0
  %148 = vmatprep.subr.mxu0 0.0
  %149 = vmatpush2.msra.mxu0 0.0
  %150 = vmatprep.subr.mxu0 0.0
  %151 = vmatpush2.msra.mxu0 0.0
  %152 = vmatprep.subr.mxu0 0.0
  %153 = vmatpush2.msra.mxu0 0.0
  %154 = vmatprep.subr.mxu0 0.0
  %155 = vmatpush2.msra.mxu0 0.0
  %156 = vmatprep.subr.mxu0 0.0
  %157 = vmatpush2.msra.mxu0 0.0
  %158 = vmatprep.mubr.f32.mxu0 0.0
  %159 = vmatmul.mubr.f32.gmra.mxu0 %v47
  %v160 = vpop.f32.mrf.mxu0
  %v161 = vadd.f32 %v43, %v160
  %v162 = vpop.f32.mrf.mxu0
  %163 = vmatprep.mubr.f32.mxu0 0.0
  %164 = vmatmul.mubr.f32.gmra.mxu0 %v50
  %v165 = vpop.f32.mrf.mxu0
  %v166 = vadd.f32 %v43, %v165
  %v167 = vpop.f32.mrf.mxu0
  %168 = vmatprep.mubr.f32.mxu0 0.0
  %169 = vmatmul.mubr.f32.gmra.mxu0 %v53
  %v170 = vpop.f32.mrf.mxu0
  %v171 = vadd.f32 %v43, %v170
  %v172 = vpop.f32.mrf.mxu0
  %173 = vmatprep.mubr.f32.mxu0 0.0
  %174 = vmatmul.mubr.f32.gmra.mxu0 %v56
  %v175 = vpop.f32.mrf.mxu0
  %v176 = vadd.f32 %v43, %v175
  %v177 = vpop.f32.mrf.mxu0
  %178 = vmatprep.mubr.f32.mxu0 0.0
  %179 = vmatmul.mubr.f32.gmra.mxu0 %v59
  %v180 = vpop.f32.mrf.mxu0
  %v181 = vadd.f32 %v43, %v180
  %v182 = vpop.f32.mrf.mxu0
  %183 = vmatprep.mubr.f32.mxu0 0.0
  %184 = vmatmul.mubr.f32.gmra.mxu0 %v62
  %v185 = vpop.f32.mrf.mxu0
  %v186 = vadd.f32 %v43, %v185
  %v187 = vpop.f32.mrf.mxu0
  %188 = vmatprep.mubr.f32.mxu0 0.0
  %189 = vmatmul.mubr.f32.gmra.mxu0 %v65
  %v190 = vpop.f32.mrf.mxu0
  %v191 = vadd.f32 %v43, %v190
  %v192 = vpop.f32.mrf.mxu0
  %193 = vmatprep.mubr.f32.mxu0 0.0
  %194 = vmatmul.mubr.f32.gmra.mxu0 %v68
  %v195 = vpop.f32.mrf.mxu0
  %v196 = vadd.f32 %v43, %v195
  %v197 = vpop.f32.mrf.mxu0
  %198 = vmatprep.mubr.f32.mxu0 0.0
  %199 = vmatmul.mubr.f32.gmra.mxu0 %v71
  %v200 = vpop.f32.mrf.mxu0
  %v201 = vadd.f32 %v43, %v200
  %v202 = vpop.f32.mrf.mxu0
  %203 = vmatprep.mubr.f32.mxu0 0.0
  %204 = vmatmul.mubr.f32.gmra.mxu0 %v74
  %v205 = vpop.f32.mrf.mxu0
  %v206 = vadd.f32 %v43, %v205
  %v207 = vpop.f32.mrf.mxu0
  %208 = vmatprep.mubr.f32.mxu0 0.0
  %209 = vmatmul.mubr.f32.gmra.mxu0 %v77
  %v210 = vpop.f32.mrf.mxu0
  %v211 = vadd.f32 %v43, %v210
  %v212 = vpop.f32.mrf.mxu0
  %213 = vmatprep.mubr.f32.mxu0 0.0
  %214 = vmatmul.mubr.f32.gmra.mxu0 %v80
  %v215 = vpop.f32.mrf.mxu0
  %v216 = vadd.f32 %v43, %v215
  %v217 = vpop.f32.mrf.mxu0
  %218 = vmatprep.mubr.f32.mxu0 0.0
  %219 = vmatmul.mubr.f32.gmra.mxu0 %v83
  %v220 = vpop.f32.mrf.mxu0
  %v221 = vadd.f32 %v43, %v220
  %v222 = vpop.f32.mrf.mxu0
  %223 = vmatprep.mubr.f32.mxu0 0.0
  %224 = vmatmul.mubr.f32.gmra.mxu0 %v86
  %v225 = vpop.f32.mrf.mxu0
  %v226 = vadd.f32 %v43, %v225
  %v227 = vpop.f32.mrf.mxu0
  %228 = vmatprep.mubr.f32.mxu0 0.0
  %229 = vmatmul.mubr.f32.gmra.mxu0 %v89
  %v230 = vpop.f32.mrf.mxu0
  %v231 = vadd.f32 %v43, %v230
  %v232 = vpop.f32.mrf.mxu0
  %233 = vmatprep.mubr.f32.mxu0 0.0
  %234 = vmatmul.mubr.f32.gmra.mxu0 %v92
  %v235 = vpop.f32.mrf.mxu0
  %v236 = vadd.f32 %v43, %v235
  %v237 = vpop.f32.mrf.mxu0
  %238 = vdwg.mxu0
  %239 = vst.msk [vmem:[%s3] sm:$0xff] %vm45, %v161
  %240 = vst.msk [vmem:[%s3 + $0x8] sm:$0xff] %vm45, %v166
  %241 = vst.msk [vmem:[%s3 + $0x10] sm:$0xff] %vm45, %v171
  %242 = vst.msk [vmem:[%s3 + $0x18] sm:$0xff] %vm45, %v176
  %243 = vst.msk [vmem:[%s3 + $0x20] sm:$0xff] %vm45, %v181
  %244 = vst.msk [vmem:[%s3 + $0x28] sm:$0xff] %vm45, %v186
  %245 = vst.msk [vmem:[%s3 + $0x30] sm:$0xff] %vm45, %v191
  %246 = vst.msk [vmem:[%s3 + $0x38] sm:$0xff] %vm45, %v196
  %247 = vst.msk [vmem:[%s3 + $0x40] sm:$0xff] %vm45, %v201
  %248 = vst.msk [vmem:[%s3 + $0x48] sm:$0xff] %vm45, %v206
  %249 = vst.msk [vmem:[%s3 + $0x50] sm:$0xff] %vm45, %v211
  %250 = vst.msk [vmem:[%s3 + $0x58] sm:$0xff] %vm45, %v216
  %251 = vst.msk [vmem:[%s3 + $0x60] sm:$0xff] %vm45, %v221
  %252 = vst.msk [vmem:[%s3 + $0x68] sm:$0xff] %vm45, %v226
  %253 = vst.msk [vmem:[%s3 + $0x70] sm:$0xff] %vm45, %v231
  %254 = vst.msk [vmem:[%s3 + $0x78] sm:$0xff] %vm45, %v236
  // Predicated region
  $region14: #{efficient_attention_forward.4} parent=0 // pred_check
    _
  $region15: #{efficient_attention_forward.4} parent=0 // pred_check_branch
    %256 = sbr.rel (0) target = $region17
  $region16: #{efficient_attention_forward.4} parent=0 // pred_region
    _
  $region17: #{efficient_attention_forward.4} parent=0 // pred_fallthru
    _
  // Predicated region
  $region18: #{efficient_attention_forward.4} parent=0 // pred_check
    _
  $region19: #{efficient_attention_forward.4} parent=0 // pred_check_branch
    %258 = sbr.rel (0) target = $region21
  $region20: #{efficient_attention_forward.4} parent=0 // pred_region
    _
  $region21: #{efficient_attention_forward.4} parent=0 // pred_fallthru
    _

// kernel: efficient_attention_forward.7
$region0: #{efficient_attention_forward.7}
  #allocation0 [shape = 'u32[]', space=smem, size = 0x4, offset = 0x4, fixed_abs, tag = 'smem constant byte address 0x4 - core index']
  #allocation1 [shape = 'u32[144,128]{1,0:T(1,128)}', space=vmem, size = 0x12000, scoped, tag = 'internal scratch']
  %s0 = inlined_call_operand.vmem [shape: f32[128,64], index: 0, kind: input, shape index: {}]
  %s1 = inlined_call_operand.vmem [shape: f32[64,64], index: 1, kind: input, shape index: {}]
  %s2 = inlined_call_operand.vmem [shape: f32[1,64], index: 2, kind: input, shape index: {}]
  %s3 = inlined_call_operand.hbm [shape: f32[128,64], index: 3, kind: output, shape index: {}]
  %s4 = sld [smem:[#allocation0]]
  $region22: #{efficient_attention_forward.7} parent=0
    _
  %s6 = ssub.s32 1, %s4
  %s7 = scalar_select 0, %s6, %s4
  $region1: #{efficient_attention_forward.7} parent=0
    #allocation2 [shape = 'u8[65536]{0}', space=vmem, size = 0x10000, scoped, tag = 'output window, operand 0, single buffered']
    #allocation3 [shape = 's32[1]{0}', space=sflag, size = 0x4, scoped, tag = 'scoped memory for efficient_attention_forward.7']
    %8 = vsyncpa [#allocation3], 0
    // Predicated region
    $region2: #{efficient_attention_forward.7} parent=1 // pred_check
      _
    $region3: #{efficient_attention_forward.7} parent=1 // pred_check_branch
      %10 = sbr.rel (0) target = $region5
    $region4: #{efficient_attention_forward.7} parent=1 // pred_region
      _
    $region5: #{efficient_attention_forward.7} parent=1 // pred_fallthru
      _
    // Predicated region
    $region6: #{efficient_attention_forward.7} parent=1 // pred_check
      _
    $region7: #{efficient_attention_forward.7} parent=1 // pred_check_branch
      %12 = sbr.rel (0) target = $region9
    $region8: #{efficient_attention_forward.7} parent=1 // pred_region
      _
    $region9: #{efficient_attention_forward.7} parent=1 // pred_fallthru
      _
    // Predicated region
    $region10: #{efficient_attention_forward.7} parent=1 // pred_check
      _
    $region11: #{efficient_attention_forward.7} parent=1 // pred_check_branch
      %14 = sbr.rel (0) target = $region13
    $region12: #{efficient_attention_forward.7} parent=1 // pred_region
      _
    $region13: #{efficient_attention_forward.7} parent=1 // pred_fallthru
      _
    %v15 = vld [vmem:[%s0] sm:$0xff]
    %v16 = vld [vmem:[%s0 + $0x8] sm:$0xff]
    %v17 = vld [vmem:[%s0 + $0x10] sm:$0xff]
    %v18 = vld [vmem:[%s0 + $0x18] sm:$0xff]
    %v19 = vld [vmem:[%s0 + $0x20] sm:$0xff]
    %v20 = vld [vmem:[%s0 + $0x28] sm:$0xff]
    %v21 = vld [vmem:[%s0 + $0x30] sm:$0xff]
    %v22 = vld [vmem:[%s0 + $0x38] sm:$0xff]
    %v23 = vld [vmem:[%s0 + $0x40] sm:$0xff]
    %v24 = vld [vmem:[%s0 + $0x48] sm:$0xff]
    %v25 = vld [vmem:[%s0 + $0x50] sm:$0xff]
    %v26 = vld [vmem:[%s0 + $0x58] sm:$0xff]
    %v27 = vld [vmem:[%s0 + $0x60] sm:$0xff]
    %v28 = vld [vmem:[%s0 + $0x68] sm:$0xff]
    %v29 = vld [vmem:[%s0 + $0x70] sm:$0xff]
    %v30 = vld [vmem:[%s0 + $0x78] sm:$0xff]
    %v31 = vld [vmem:[%s1] sm:$0xff]
    %v32 = vld [vmem:[%s1 + $0x8] sm:$0xff]
    %v33 = vld [vmem:[%s1 + $0x10] sm:$0xff]
    %v34 = vld [vmem:[%s1 + $0x18] sm:$0xff]
    %v35 = vld [vmem:[%s1 + $0x20] sm:$0xff]
    %v36 = vld [vmem:[%s1 + $0x28] sm:$0xff]
    %v37 = vld [vmem:[%s1 + $0x30] sm:$0xff]
    %v38 = vld [vmem:[%s1 + $0x38] sm:$0xff]
    %v39 = vld [vmem:[%s2] sm:$0x1]
    %v41 = vlaneseq
    %v42 = vshrl.u32 %v41, 7
    %v43 = vsub.s32 0, %v42
    %v44 = vrot.slane %v39, %v43
    %vm46 = vcmask 523264
    %v48 = vsel %vm46, %v15, 0
    %v51 = vsel %vm46, %v16, 0
    %v54 = vsel %vm46, %v17, 0
    %v57 = vsel %vm46, %v18, 0
    %v60 = vsel %vm46, %v19, 0
    %v63 = vsel %vm46, %v20, 0
    %v66 = vsel %vm46, %v21, 0
    %v69 = vsel %vm46, %v22, 0
    %v72 = vsel %vm46, %v23, 0
    %v75 = vsel %vm46, %v24, 0
    %v78 = vsel %vm46, %v25, 0
    %v81 = vsel %vm46, %v26, 0
    %v84 = vsel %vm46, %v27, 0
    %v87 = vsel %vm46, %v28, 0
    %v90 = vsel %vm46, %v29, 0
    %v93 = vsel %vm46, %v30, 0
    %95 = vmatprep.subr.mxu0 0.0
    %96 = vmatpush1.msra.mxu0 0.0
    %97 = vmatprep.subr.mxu0 0.0
    %98 = vmatpush1.msra.mxu0 0.0
    %99 = vmatprep.subr.mxu0 0.0
    %100 = vmatpush1.msra.mxu0 0.0
    %101 = vmatprep.subr.mxu0 0.0
    %102 = vmatpush1.msra.mxu0 0.0
    %103 = vmatprep.subr.mxu0 0.0
    %104 = vmatpush1.msra.mxu0 0.0
    %105 = vmatprep.subr.mxu0 0.0
    %106 = vmatpush1.msra.mxu0 0.0
    %107 = vmatprep.subr.mxu0 0.0
    %108 = vmatpush1.msra.mxu0 0.0
    %109 = vmatprep.subr.mxu0 0.0
    %110 = vmatpush1.msra.mxu0 0.0
    %111 = vmatprep.subr.mxu0 0.0
    %112 = vmatpush1.msra.mxu0 %v38
    %113 = vmatprep.subr.mxu0 0.0
    %114 = vmatpush1.msra.mxu0 %v37
    %115 = vmatprep.subr.mxu0 0.0
    %116 = vmatpush1.msra.mxu0 %v36
    %117 = vmatprep.subr.mxu0 0.0
    %118 = vmatpush1.msra.mxu0 %v35
    %119 = vmatprep.subr.mxu0 0.0
    %120 = vmatpush1.msra.mxu0 %v34
    %121 = vmatprep.subr.mxu0 0.0
    %122 = vmatpush1.msra.mxu0 %v33
    %123 = vmatprep.subr.mxu0 0.0
    %124 = vmatpush1.msra.mxu0 %v32
    %125 = vmatprep.subr.mxu0 0.0
    %126 = vmatpush1.msra.mxu0 %v31
    %127 = vmatprep.subr.mxu0 0.0
    %128 = vmatpush2.msra.mxu0 0.0
    %129 = vmatprep.subr.mxu0 0.0
    %130 = vmatpush2.msra.mxu0 0.0
    %131 = vmatprep.subr.mxu0 0.0
    %132 = vmatpush2.msra.mxu0 0.0
    %133 = vmatprep.subr.mxu0 0.0
    %134 = vmatpush2.msra.mxu0 0.0
    %135 = vmatprep.subr.mxu0 0.0
    %136 = vmatpush2.msra.mxu0 0.0
    %137 = vmatprep.subr.mxu0 0.0
    %138 = vmatpush2.msra.mxu0 0.0
    %139 = vmatprep.subr.mxu0 0.0
    %140 = vmatpush2.msra.mxu0 0.0
    %141 = vmatprep.subr.mxu0 0.0
    %142 = vmatpush2.msra.mxu0 0.0
    %143 = vmatprep.subr.mxu0 0.0
    %144 = vmatpush2.msra.mxu0 0.0
    %145 = vmatprep.subr.mxu0 0.0
    %146 = vmatpush2.msra.mxu0 0.0
    %147 = vmatprep.subr.mxu0 0.0
    %148 = vmatpush2.msra.mxu0 0.0
    %149 = vmatprep.subr.mxu0 0.0
    %150 = vmatpush2.msra.mxu0 0.0
    %151 = vmatprep.subr.mxu0 0.0
    %152 = vmatpush2.msra.mxu0 0.0
    %153 = vmatprep.subr.mxu0 0.0
    %154 = vmatpush2.msra.mxu0 0.0
    %155 = vmatprep.subr.mxu0 0.0
    %156 = vmatpush2.msra.mxu0 0.0
    %157 = vmatprep.subr.mxu0 0.0
    %158 = vmatpush2.msra.mxu0 0.0
    %159 = vmatprep.mubr.f32.mxu0 0.0
    %160 = vmatmul.mubr.f32.gmra.mxu0 %v48
    %v161 = vpop.f32.mrf.mxu0
    %v162 = vadd.f32 %v44, %v161
    %v163 = vpop.f32.mrf.mxu0
    %164 = vmatprep.mubr.f32.mxu0 0.0
    %165 = vmatmul.mubr.f32.gmra.mxu0 %v51
    %v166 = vpop.f32.mrf.mxu0
    %v167 = vadd.f32 %v44, %v166
    %v168 = vpop.f32.mrf.mxu0
    %169 = vmatprep.mubr.f32.mxu0 0.0
    %170 = vmatmul.mubr.f32.gmra.mxu0 %v54
    %v171 = vpop.f32.mrf.mxu0
    %v172 = vadd.f32 %v44, %v171
    %v173 = vpop.f32.mrf.mxu0
    %174 = vmatprep.mubr.f32.mxu0 0.0
    %175 = vmatmul.mubr.f32.gmra.mxu0 %v57
    %v176 = vpop.f32.mrf.mxu0
    %v177 = vadd.f32 %v44, %v176
    %v178 = vpop.f32.mrf.mxu0
    %179 = vmatprep.mubr.f32.mxu0 0.0
    %180 = vmatmul.mubr.f32.gmra.mxu0 %v60
    %v181 = vpop.f32.mrf.mxu0
    %v182 = vadd.f32 %v44, %v181
    %v183 = vpop.f32.mrf.mxu0
    %184 = vmatprep.mubr.f32.mxu0 0.0
    %185 = vmatmul.mubr.f32.gmra.mxu0 %v63
    %v186 = vpop.f32.mrf.mxu0
    %v187 = vadd.f32 %v44, %v186
    %v188 = vpop.f32.mrf.mxu0
    %189 = vmatprep.mubr.f32.mxu0 0.0
    %190 = vmatmul.mubr.f32.gmra.mxu0 %v66
    %v191 = vpop.f32.mrf.mxu0
    %v192 = vadd.f32 %v44, %v191
    %v193 = vpop.f32.mrf.mxu0
    %194 = vmatprep.mubr.f32.mxu0 0.0
    %195 = vmatmul.mubr.f32.gmra.mxu0 %v69
    %v196 = vpop.f32.mrf.mxu0
    %v197 = vadd.f32 %v44, %v196
    %v198 = vpop.f32.mrf.mxu0
    %199 = vmatprep.mubr.f32.mxu0 0.0
    %200 = vmatmul.mubr.f32.gmra.mxu0 %v72
    %v201 = vpop.f32.mrf.mxu0
    %v202 = vadd.f32 %v44, %v201
    %v203 = vpop.f32.mrf.mxu0
    %204 = vmatprep.mubr.f32.mxu0 0.0
    %205 = vmatmul.mubr.f32.gmra.mxu0 %v75
    %v206 = vpop.f32.mrf.mxu0
    %v207 = vadd.f32 %v44, %v206
    %v208 = vpop.f32.mrf.mxu0
    %209 = vmatprep.mubr.f32.mxu0 0.0
    %210 = vmatmul.mubr.f32.gmra.mxu0 %v78
    %v211 = vpop.f32.mrf.mxu0
    %v212 = vadd.f32 %v44, %v211
    %v213 = vpop.f32.mrf.mxu0
    %214 = vmatprep.mubr.f32.mxu0 0.0
    %215 = vmatmul.mubr.f32.gmra.mxu0 %v81
    %v216 = vpop.f32.mrf.mxu0
    %v217 = vadd.f32 %v44, %v216
    %v218 = vpop.f32.mrf.mxu0
    %219 = vmatprep.mubr.f32.mxu0 0.0
    %220 = vmatmul.mubr.f32.gmra.mxu0 %v84
    %v221 = vpop.f32.mrf.mxu0
    %v222 = vadd.f32 %v44, %v221
    %v223 = vpop.f32.mrf.mxu0
    %224 = vmatprep.mubr.f32.mxu0 0.0
    %225 = vmatmul.mubr.f32.gmra.mxu0 %v87
    %v226 = vpop.f32.mrf.mxu0
    %v227 = vadd.f32 %v44, %v226
    %v228 = vpop.f32.mrf.mxu0
    %229 = vmatprep.mubr.f32.mxu0 0.0
    %230 = vmatmul.mubr.f32.gmra.mxu0 %v90
    %v231 = vpop.f32.mrf.mxu0
    %v232 = vadd.f32 %v44, %v231
    %v233 = vpop.f32.mrf.mxu0
    %234 = vmatprep.mubr.f32.mxu0 0.0
    %235 = vmatmul.mubr.f32.gmra.mxu0 %v93
    %v236 = vpop.f32.mrf.mxu0
    %v237 = vadd.f32 %v44, %v236
    %v238 = vpop.f32.mrf.mxu0
    %239 = vdwg.mxu0
    %240 = vst.msk [vmem:[#allocation2] sm:$0xff] %vm46, %v162
    %241 = vst.msk [vmem:[#allocation2 + $0x8] sm:$0xff] %vm46, %v167
    %242 = vst.msk [vmem:[#allocation2 + $0x10] sm:$0xff] %vm46, %v172
    %243 = vst.msk [vmem:[#allocation2 + $0x18] sm:$0xff] %vm46, %v177
    %244 = vst.msk [vmem:[#allocation2 + $0x20] sm:$0xff] %vm46, %v182
    %245 = vst.msk [vmem:[#allocation2 + $0x28] sm:$0xff] %vm46, %v187
    %246 = vst.msk [vmem:[#allocation2 + $0x30] sm:$0xff] %vm46, %v192
    %247 = vst.msk [vmem:[#allocation2 + $0x38] sm:$0xff] %vm46, %v197
    %248 = vst.msk [vmem:[#allocation2 + $0x40] sm:$0xff] %vm46, %v202
    %249 = vst.msk [vmem:[#allocation2 + $0x48] sm:$0xff] %vm46, %v207
    %250 = vst.msk [vmem:[#allocation2 + $0x50] sm:$0xff] %vm46, %v212
    %251 = vst.msk [vmem:[#allocation2 + $0x58] sm:$0xff] %vm46, %v217
    %252 = vst.msk [vmem:[#allocation2 + $0x60] sm:$0xff] %vm46, %v222
    %253 = vst.msk [vmem:[#allocation2 + $0x68] sm:$0xff] %vm46, %v227
    %254 = vst.msk [vmem:[#allocation2 + $0x70] sm:$0xff] %vm46, %v232
    %255 = vst.msk [vmem:[#allocation2 + $0x78] sm:$0xff] %vm46, %v237
    // Predicated region
    $region14: #{efficient_attention_forward.7} parent=1 // pred_check
      _
    $region15: #{efficient_attention_forward.7} parent=1 // pred_check_branch
      %257 = sbr.rel (0) target = $region17
    $region16: #{efficient_attention_forward.7} parent=1 // pred_region
      %s259 = ssub.s32 2048, 2048
      %260 = vsyncadd [#allocation3], %s259
      %s261 = sshll.u32 [#allocation2], 4
      %s262 = int_to_ptr.vmem [resolvable:$true] %s261
      %267 = dma.vmem_to_hbm [thread:$0]  %s262, 2048, %s3, [#allocation3], 128, 128, 8
    $region17: #{efficient_attention_forward.7} parent=1 // pred_fallthru
      _
    // Predicated region
    $region18: #{efficient_attention_forward.7} parent=1 // pred_check
      _
    $region19: #{efficient_attention_forward.7} parent=1 // pred_check_branch
      %269 = sbr.rel (0) target = $region21
    $region20: #{efficient_attention_forward.7} parent=1 // pred_region
      %270 = dma.done [#allocation3], 2048
    $region21: #{efficient_attention_forward.7} parent=1 // pred_fallthru
      _
    %271 = vsyncpa [#allocation3], 1

// kernel: efficient_attention_forward.6
$region0: #{efficient_attention_forward.6}
  #allocation0 [shape = 'u32[]', space=smem, size = 0x4, offset = 0x4, fixed_abs, tag = 'smem constant byte address 0x4 - core index']
  #allocation1 [shape = 'u32[144,128]{1,0:T(1,128)}', space=vmem, size = 0x12000, scoped, tag = 'internal scratch']
  %s0 = inlined_call_operand.vmem [shape: f32[2,64,64], index: 0, kind: input, shape index: {}]
  %s1 = inlined_call_operand.vmem [shape: f32[2,16,128], index: 1, kind: input, shape index: {}]
  %s2 = inlined_call_operand.vmem [shape: f32[2,64,64], index: 2, kind: output, shape index: {}]
  %s3 = sld [smem:[#allocation0]]
  $region41: #{efficient_attention_forward.6} parent=0
    _
  %s5 = ssub.s32 1, %s3
  %s6 = scalar_select 0, %s5, %s3
  loop: start=0, step=1, limit=4
  $region2: #{efficient_attention_forward.6} parent=0 // loop_pre_header
    _
  $region3: #{efficient_attention_forward.6} parent=0 // loop_header
    %s8 = sphi 0, %s12
    %p9 = scmp.ge.s32.totalorder %s8, 4
    %s18 = sphi 0, %s20
    %s21 = sphi 0, %s18
    %s22 = sphi 0, %s21
    %s38 = sphi 0, %s22
    %s44 = sphi 0, %s46
    %s47 = sphi 0, %s44
    %s48 = sphi 0, %s47
    %s64 = sphi 0, %s48
    %s70 = sphi 0, %s72
    %s73 = sphi 0, %s70
    %s74 = sphi 0, %s73
    %s90 = sphi 0, %s74
  $region4: #{efficient_attention_forward.6} parent=0 // loop_header_branch
    %11 = sbr.rel (%p9) target = $region8
  $region5: #{efficient_attention_forward.6} parent=0 // loop_body
    %s13 = ssub.s32 %s8, 1
    %s14 = ssub.s32 %s8, 2
    %s15 = sadd.s32 %s8, 1
    %s16 = ssub.s32 %s8, %s15
    %p17 = scmp.eq.s32.totalorder %s16, 0
    %s19 = sadd.s32 %s18, 1
    %s20 = scalar_select %p17, %s18, %s19
    %p23 = pneg %p17
    %p24 = scmp.eq.s32.totalorder %s8, 1
    %p25 = por %p23, %p24
    %p26 = scmp.ne.s32.totalorder %s18, %s21
    %p27 = scmp.eq.s32.totalorder %s8, 0
    %p28 = por %p26, %p27
    %p29 = scmp.ne.s32.totalorder %s18, %s21
    %p30 = scmp.eq.s32.totalorder %s13, 1
    %p31 = por %p29, %p30
    %p32 = scmp.ne.s32.totalorder %s21, %s22
    %p33 = scmp.eq.s32.totalorder %s13, 0
    %p34 = por %p32, %p33
    %p35 = scmp.ne.s32.totalorder %s21, %s22
    %p36 = scmp.eq.s32.totalorder %s14, 1
    %p37 = por %p35, %p36
    %p39 = scmp.ne.s32.totalorder %s22, %s38
    %p40 = scmp.eq.s32.totalorder %s14, 0
    %p41 = por %p39, %p40
    %s42 = ssub.s32 %s8, %s15
    %p43 = scmp.eq.s32.totalorder %s42, 0
    %s45 = sadd.s32 %s44, 1
    %s46 = scalar_select %p43, %s44, %s45
    %p49 = pneg %p43
    %p50 = scmp.eq.s32.totalorder %s8, 1
    %p51 = por %p49, %p50
    %p52 = scmp.ne.s32.totalorder %s44, %s47
    %p53 = scmp.eq.s32.totalorder %s8, 0
    %p54 = por %p52, %p53
    %p55 = scmp.ne.s32.totalorder %s44, %s47
    %p56 = scmp.eq.s32.totalorder %s13, 1
    %p57 = por %p55, %p56
    %p58 = scmp.ne.s32.totalorder %s47, %s48
    %p59 = scmp.eq.s32.totalorder %s13, 0
    %p60 = por %p58, %p59
    %p61 = scmp.ne.s32.totalorder %s47, %s48
    %p62 = scmp.eq.s32.totalorder %s14, 1
    %p63 = por %p61, %p62
    %p65 = scmp.ne.s32.totalorder %s48, %s64
    %p66 = scmp.eq.s32.totalorder %s14, 0
    %p67 = por %p65, %p66
    %s68 = ssub.s32 %s8, %s15
    %p69 = scmp.eq.s32.totalorder %s68, 0
    %s71 = sadd.s32 %s70, 1
    %s72 = scalar_select %p69, %s70, %s71
    %p75 = pneg %p69
    %p76 = scmp.eq.s32.totalorder %s8, 1
    %p77 = por %p75, %p76
    %p78 = scmp.ne.s32.totalorder %s70, %s73
    %p79 = scmp.eq.s32.totalorder %s8, 0
    %p80 = por %p78, %p79
    %p81 = scmp.ne.s32.totalorder %s70, %s73
    %p82 = scmp.eq.s32.totalorder %s13, 1
    %p83 = por %p81, %p82
    %p84 = scmp.ne.s32.totalorder %s73, %s74
    %p85 = scmp.eq.s32.totalorder %s13, 0
    %p86 = por %p84, %p85
    %p87 = scmp.ne.s32.totalorder %s73, %s74
    %p88 = scmp.eq.s32.totalorder %s14, 1
    %p89 = por %p87, %p88
    %p91 = scmp.ne.s32.totalorder %s74, %s90
    %p92 = scmp.eq.s32.totalorder %s14, 0
    %p93 = por %p91, %p92
    %p94 = scmp.le.s32.totalorder 1, %s8
    %p95 = scmp.lt.s32.totalorder %s8, 3
    %p96 = pnand %p94, %p95
    %p97 = pneg %p96
    // Predicated region
    $region9: #{efficient_attention_forward.6} parent=5 // pred_check
      _
    $region10: #{efficient_attention_forward.6} parent=5 // pred_check_branch
      %99 = sbr.rel (%p96) target = $region12
    $region11: #{efficient_attention_forward.6} parent=5 // pred_region
      %s100 = ssub.s32 %s8, 1
    $region12: #{efficient_attention_forward.6} parent=5 // pred_fallthru
      _
    %p101 = scmp.lt.s32.totalorder %s8, 2
    // Predicated region
    $region13: #{efficient_attention_forward.6} parent=5 // pred_check
      %p102 = pneg %p101
    $region14: #{efficient_attention_forward.6} parent=5 // pred_check_branch
      %104 = sbr.rel (%p102) target = $region16
    $region15: #{efficient_attention_forward.6} parent=5 // pred_region
      // Predicated region
      $region17: #{efficient_attention_forward.6} parent=15 // pred_check
        %p105 = pneg %p28
      $region18: #{efficient_attention_forward.6} parent=15 // pred_check_branch
        %107 = sbr.rel (%p105) target = $region20
      $region19: #{efficient_attention_forward.6} parent=15 // pred_region
        %p108 = scmp.lt.s32.totalorder %s8, 1
        %s109 = scalar_select %p108, %s8, 1
        %s110 = smul.addr %s109, 8
        %s111 = smul.addr %s110, 8
        %s112 = scalar_lea.vmem %s0, %s111
      $region20: #{efficient_attention_forward.6} parent=15 // pred_fallthru
        _
      // Predicated region
      $region21: #{efficient_attention_forward.6} parent=15 // pred_check
        %p113 = pneg %p54
      $region22: #{efficient_attention_forward.6} parent=15 // pred_check_branch
        %115 = sbr.rel (%p113) target = $region24
      $region23: #{efficient_attention_forward.6} parent=15 // pred_region
        %p116 = scmp.lt.s32.totalorder %s8, 1
        %s117 = scalar_select %p116, %s8, 1
        %s118 = smul.addr %s117, 2
        %s119 = smul.addr %s118, 8
        %s120 = scalar_lea.vmem %s1, %s119
      $region24: #{efficient_attention_forward.6} parent=15 // pred_fallthru
        _
    $region16: #{efficient_attention_forward.6} parent=5 // pred_fallthru
      _
    %p121 = scmp.le.s32.totalorder 1, %s8
    %p122 = scmp.lt.s32.totalorder %s8, 3
    %p123 = pnand %p121, %p122
    %p124 = pneg %p123
    // Predicated region
    $region25: #{efficient_attention_forward.6} parent=5 // pred_check
      _
    $region26: #{efficient_attention_forward.6} parent=5 // pred_check_branch
      %126 = sbr.rel (%p123) target = $region28
    $region27: #{efficient_attention_forward.6} parent=5 // pred_region
      %s127 = ssub.s32 %s8, 1
      %p128 = scmp.lt.s32.totalorder %s13, 1
      %s129 = scalar_select %p128, %s13, 1
      %s130 = smul.addr %s129, 8
      %s131 = smul.addr %s130, 8
      %s132 = scalar_lea.vmem %s0, %s131
      %p133 = pneg %p34
      %p134 = pneg %p31
      %p135 = scmp.lt.s32.totalorder %s13, 1
      %s136 = scalar_select %p135, %s13, 1
      %s137 = smul.addr %s136, 2
      %s138 = smul.addr %s137, 8
      %s139 = scalar_lea.vmem %s1, %s138
      %p140 = pneg %p60
      %p141 = pneg %p57
      %p142 = pneg %p86
      %p143 = pneg %p83
      %p144 = scmp.lt.s32.totalorder %s13, 1
      %s145 = scalar_select %p144, %s13, 1
      %s146 = smul.addr %s145, 8
      %s147 = smul.addr %s146, 8
      %s148 = scalar_lea.vmem %s2, %s147
      %p149 = scmp.lt.s32.totalorder %s13, 1
      %s150 = scalar_select %p149, %s13, 1
      %s151 = smul.addr %s150, 8
      %s152 = smul.addr %s151, 8
      %s153 = scalar_lea.vmem %s0, %s152
      %p154 = scmp.lt.s32.totalorder %s13, 1
      %s155 = scalar_select %p154, %s13, 1
      %s156 = smul.addr %s155, 2
      %s157 = smul.addr %s156, 8
      %s158 = scalar_lea.vmem %s1, %s157
      %p159 = scmp.lt.s32.totalorder %s13, 1
      %s160 = scalar_select %p159, %s13, 1
      %s161 = smul.addr %s160, 8
      %s162 = smul.addr %s161, 8
      %s163 = scalar_lea.vmem %s2, %s162
      %v164 = vld [vmem:[%s153] sm:$0xff]
      %v165 = vld [vmem:[%s153 + $0x8] sm:$0xff]
      %v166 = vld [vmem:[%s153 + $0x10] sm:$0xff]
      %v167 = vld [vmem:[%s153 + $0x18] sm:$0xff]
      %v168 = vld [vmem:[%s153 + $0x20] sm:$0xff]
      %v169 = vld [vmem:[%s153 + $0x28] sm:$0xff]
      %v170 = vld [vmem:[%s153 + $0x30] sm:$0xff]
      %v171 = vld [vmem:[%s153 + $0x38] sm:$0xff]
      %v172 = vld [vmem:[%s158] sm:$0xff]
      %v173 = vld [vmem:[%s158 + $0x8] sm:$0xff]
      %vm174 = vcmask 261120
      %v176 = vsel %vm174, %v164, 0
      %v179 = vsel %vm174, %v165, 0
      %v182 = vsel %vm174, %v166, 0
      %v185 = vsel %vm174, %v167, 0
      %v188 = vsel %vm174, %v168, 0
      %v191 = vsel %vm174, %v169, 0
      %v194 = vsel %vm174, %v170, 0
      %v197 = vsel %vm174, %v171, 0
      %v200 = vsel %vm174, %v172, 0
      %v203 = vsel %vm174, %v173, 0
      %205 = vmatprep.subr.mxu0 0.0
      %206 = vmatpush1.xpose.msra.mxu0 0.0
      %207 = vmatprep.subr.mxu0 0.0
      %208 = vmatpush1.xpose.msra.mxu0 0.0
      %209 = vmatprep.subr.mxu0 0.0
      %210 = vmatpush1.xpose.msra.mxu0 0.0
      %211 = vmatprep.subr.mxu0 0.0
      %212 = vmatpush1.xpose.msra.mxu0 0.0
      %213 = vmatprep.subr.mxu0 0.0
      %214 = vmatpush1.xpose.msra.mxu0 0.0
      %215 = vmatprep.subr.mxu0 0.0
      %216 = vmatpush1.xpose.msra.mxu0 0.0
      %217 = vmatprep.subr.mxu0 0.0
      %218 = vmatpush1.xpose.msra.mxu0 0.0
      %219 = vmatprep.subr.mxu0 0.0
      %220 = vmatpush1.xpose.msra.mxu0 0.0
      %221 = vmatprep.subr.mxu0 0.0
      %222 = vmatpush1.xpose.msra.mxu0 0.0
      %223 = vmatprep.subr.mxu0 0.0
      %224 = vmatpush1.xpose.msra.mxu0 0.0
      %225 = vmatprep.subr.mxu0 0.0
      %226 = vmatpush1.xpose.msra.mxu0 0.0
      %227 = vmatprep.subr.mxu0 0.0
      %228 = vmatpush1.xpose.msra.mxu0 0.0
      %229 = vmatprep.subr.mxu0 0.0
      %230 = vmatpush1.xpose.msra.mxu0 0.0
      %231 = vmatprep.subr.mxu0 0.0
      %232 = vmatpush1.xpose.msra.mxu0 0.0
      %233 = vmatprep.subr.mxu0 0.0
      %234 = vmatpush1.xpose.msra.mxu0 %v203
      %235 = vmatprep.subr.mxu0 0.0
      %236 = vmatpush1.xpose.msra.mxu0 %v200
      %237 = vmatprep.subr.mxu0 0.0
      %238 = vmatpush2.xpose.msra.mxu0 0.0
      %239 = vmatprep.subr.mxu0 0.0
      %240 = vmatpush2.xpose.msra.mxu0 0.0
      %241 = vmatprep.subr.mxu0 0.0
      %242 = vmatpush2.xpose.msra.mxu0 0.0
      %243 = vmatprep.subr.mxu0 0.0
      %244 = vmatpush2.xpose.msra.mxu0 0.0
      %245 = vmatprep.subr.mxu0 0.0
      %246 = vmatpush2.xpose.msra.mxu0 0.0
      %247 = vmatprep.subr.mxu0 0.0
      %248 = vmatpush2.xpose.msra.mxu0 0.0
      %249 = vmatprep.subr.mxu0 0.0
      %250 = vmatpush2.xpose.msra.mxu0 0.0
      %251 = vmatprep.subr.mxu0 0.0
      %252 = vmatpush2.xpose.msra.mxu0 0.0
      %253 = vmatprep.subr.mxu0 0.0
      %254 = vmatpush2.xpose.msra.mxu0 0.0
      %255 = vmatprep.subr.mxu0 0.0
      %256 = vmatpush2.xpose.msra.mxu0 0.0
      %257 = vmatprep.subr.mxu0 0.0
      %258 = vmatpush2.xpose.msra.mxu0 0.0
      %259 = vmatprep.subr.mxu0 0.0
      %260 = vmatpush2.xpose.msra.mxu0 0.0
      %261 = vmatprep.subr.mxu0 0.0
      %262 = vmatpush2.xpose.msra.mxu0 0.0
      %263 = vmatprep.subr.mxu0 0.0
      %264 = vmatpush2.xpose.msra.mxu0 0.0
      %265 = vmatprep.subr.mxu0 0.0
      %266 = vmatpush2.xpose.msra.mxu0 0.0
      %267 = vmatprep.subr.mxu0 0.0
      %268 = vmatpush2.xpose.msra.mxu0 0.0
      %269 = vmatprep.mubr.f32.mxu0 0.0
      %270 = vmatmul.mubr.f32.gmra.mxu0 %v176
      %v271 = vpop.f32.mrf.mxu0
      %v272 = vadd.f32 0.0, %v271
      %v273 = vpop.f32.mrf.mxu0
      %274 = vmatprep.mubr.f32.mxu0 0.0
      %275 = vmatmul.mubr.f32.gmra.mxu0 %v179
      %v276 = vpop.f32.mrf.mxu0
      %v277 = vadd.f32 0.0, %v276
      %v278 = vpop.f32.mrf.mxu0
      %279 = vmatprep.mubr.f32.mxu0 0.0
      %280 = vmatmul.mubr.f32.gmra.mxu0 %v182
      %v281 = vpop.f32.mrf.mxu0
      %v282 = vadd.f32 0.0, %v281
      %v283 = vpop.f32.mrf.mxu0
      %284 = vmatprep.mubr.f32.mxu0 0.0
      %285 = vmatmul.mubr.f32.gmra.mxu0 %v185
      %v286 = vpop.f32.mrf.mxu0
      %v287 = vadd.f32 0.0, %v286
      %v288 = vpop.f32.mrf.mxu0
      %289 = vmatprep.mubr.f32.mxu0 0.0
      %290 = vmatmul.mubr.f32.gmra.mxu0 %v188
      %v291 = vpop.f32.mrf.mxu0
      %v292 = vadd.f32 0.0, %v291
      %v293 = vpop.f32.mrf.mxu0
      %294 = vmatprep.mubr.f32.mxu0 0.0
      %295 = vmatmul.mubr.f32.gmra.mxu0 %v191
      %v296 = vpop.f32.mrf.mxu0
      %v297 = vadd.f32 0.0, %v296
      %v298 = vpop.f32.mrf.mxu0
      %299 = vmatprep.mubr.f32.mxu0 0.0
      %300 = vmatmul.mubr.f32.gmra.mxu0 %v194
      %v301 = vpop.f32.mrf.mxu0
      %v302 = vadd.f32 0.0, %v301
      %v303 = vpop.f32.mrf.mxu0
      %304 = vmatprep.mubr.f32.mxu0 0.0
      %305 = vmatmul.mubr.f32.gmra.mxu0 %v197
      %v306 = vpop.f32.mrf.mxu0
      %v307 = vadd.f32 0.0, %v306
      %v308 = vpop.f32.mrf.mxu0
      %309 = vdwg.mxu0
      %vm310 = vcmask 130048
      %v311 = vsel %vm310, %v272, -inf
      %312 = vmax.xlane.f32.xlu0 %v311
      %v313 = vpop.xlane.xlu0 %312
      %v314 = vsel %vm310, %v277, -inf
      %315 = vmax.xlane.f32.xlu0 %v314
      %v316 = vpop.xlane.xlu0 %315
      %v317 = vsel %vm310, %v282, -inf
      %318 = vmax.xlane.f32.xlu0 %v317
      %v319 = vpop.xlane.xlu0 %318
      %v320 = vsel %vm310, %v287, -inf
      %321 = vmax.xlane.f32.xlu0 %v320
      %v322 = vpop.xlane.xlu0 %321
      %v323 = vsel %vm310, %v292, -inf
      %324 = vmax.xlane.f32.xlu0 %v323
      %v325 = vpop.xlane.xlu0 %324
      %v326 = vsel %vm310, %v297, -inf
      %327 = vmax.xlane.f32.xlu0 %v326
      %v328 = vpop.xlane.xlu0 %327
      %v329 = vsel %vm310, %v302, -inf
      %330 = vmax.xlane.f32.xlu0 %v329
      %v331 = vpop.xlane.xlu0 %330
      %v332 = vsel %vm310, %v307, -inf
      %333 = vmax.xlane.f32.xlu0 %v332
      %v334 = vpop.xlane.xlu0 %333
      %v335 = vsub.f32 %v272, %v313
      %v336 = vsub.f32 %v277, %v316
      %v337 = vsub.f32 %v282, %v319
      %v338 = vsub.f32 %v287, %v322
      %v339 = vsub.f32 %v292, %v325
      %v340 = vsub.f32 %v297, %v328
      %v341 = vsub.f32 %v302, %v331
      %v342 = vsub.f32 %v307, %v334
      %v343 = vmul.f32 %v335, 1.442695
      %v344 = vpow.pop %v343
      %v345 = vmul.f32 %v336, 1.442695
      %v346 = vpow.pop %v345
      %v347 = vmul.f32 %v337, 1.442695
      %v348 = vpow.pop %v347
      %v349 = vmul.f32 %v338, 1.442695
      %v350 = vpow.pop %v349
      %v351 = vmul.f32 %v339, 1.442695
      %v352 = vpow.pop %v351
      %v353 = vmul.f32 %v340, 1.442695
      %v354 = vpow.pop %v353
      %v355 = vmul.f32 %v341, 1.442695
      %v356 = vpow.pop %v355
      %v357 = vmul.f32 %v342, 1.442695
      %v358 = vpow.pop %v357
      %v359 = vsel %vm310, %v344, 0.0
      %360 = vadd.xlane.f32.xlu0 %v359
      %v361 = vpop.xlane.xlu0 %360
      %v362 = vsel %vm310, %v346, 0.0
      %363 = vadd.xlane.f32.xlu0 %v362
      %v364 = vpop.xlane.xlu0 %363
      %v365 = vsel %vm310, %v348, 0.0
      %366 = vadd.xlane.f32.xlu0 %v365
      %v367 = vpop.xlane.xlu0 %366
      %v368 = vsel %vm310, %v350, 0.0
      %369 = vadd.xlane.f32.xlu0 %v368
      %v370 = vpop.xlane.xlu0 %369
      %v371 = vsel %vm310, %v352, 0.0
      %372 = vadd.xlane.f32.xlu0 %v371
      %v373 = vpop.xlane.xlu0 %372
      %v374 = vsel %vm310, %v354, 0.0
      %375 = vadd.xlane.f32.xlu0 %v374
      %v376 = vpop.xlane.xlu0 %375
      %v377 = vsel %vm310, %v356, 0.0
      %378 = vadd.xlane.f32.xlu0 %v377
      %v379 = vpop.xlane.xlu0 %378
      %v380 = vsel %vm310, %v358, 0.0
      %381 = vadd.xlane.f32.xlu0 %v380
      %v382 = vpop.xlane.xlu0 %381
      %383 = vrot.lane.b32.xlu0 %v172, 64
      %v384 = vpop.permute.xlu0 %383
      %385 = vrot.lane.b32.xlu0 %v173, 64
      %v386 = vpop.permute.xlu0 %385
      %v390 = vsel %vm310, %v344, 0
      %v393 = vsel %vm310, %v346, 0
      %v396 = vsel %vm310, %v348, 0
      %v399 = vsel %vm310, %v350, 0
      %v402 = vsel %vm310, %v352, 0
      %v405 = vsel %vm310, %v354, 0
      %v408 = vsel %vm310, %v356, 0
      %v411 = vsel %vm310, %v358, 0
      %413 = vmatprep.subr.mxu0 0.0
      %414 = vmatpush1.msra.mxu0 0.0
      %415 = vmatprep.subr.mxu0 0.0
      %416 = vmatpush1.msra.mxu0 0.0
      %417 = vmatprep.subr.mxu0 0.0
      %418 = vmatpush1.msra.mxu0 0.0
      %419 = vmatprep.subr.mxu0 0.0
      %420 = vmatpush1.msra.mxu0 0.0
      %421 = vmatprep.subr.mxu0 0.0
      %422 = vmatpush1.msra.mxu0 0.0
      %423 = vmatprep.subr.mxu0 0.0
      %424 = vmatpush1.msra.mxu0 0.0
      %425 = vmatprep.subr.mxu0 0.0
      %426 = vmatpush1.msra.mxu0 0.0
      %427 = vmatprep.subr.mxu0 0.0
      %428 = vmatpush1.msra.mxu0 0.0
      %429 = vmatprep.subr.mxu0 0.0
      %430 = vmatpush1.msra.mxu0 0.0
      %431 = vmatprep.subr.mxu0 0.0
      %432 = vmatpush1.msra.mxu0 0.0
      %433 = vmatprep.subr.mxu0 0.0
      %434 = vmatpush1.msra.mxu0 0.0
      %435 = vmatprep.subr.mxu0 0.0
      %436 = vmatpush1.msra.mxu0 0.0
      %437 = vmatprep.subr.mxu0 0.0
      %438 = vmatpush1.msra.mxu0 0.0
      %439 = vmatprep.subr.mxu0 0.0
      %440 = vmatpush1.msra.mxu0 0.0
      %441 = vmatprep.subr.mxu0 0.0
      %442 = vmatpush1.msra.mxu0 %v386
      %443 = vmatprep.subr.mxu0 0.0
      %444 = vmatpush1.msra.mxu0 %v384
      %445 = vmatprep.subr.mxu0 0.0
      %446 = vmatpush2.msra.mxu0 0.0
      %447 = vmatprep.subr.mxu0 0.0
      %448 = vmatpush2.msra.mxu0 0.0
      %449 = vmatprep.subr.mxu0 0.0
      %450 = vmatpush2.msra.mxu0 0.0
      %451 = vmatprep.subr.mxu0 0.0
      %452 = vmatpush2.msra.mxu0 0.0
      %453 = vmatprep.subr.mxu0 0.0
      %454 = vmatpush2.msra.mxu0 0.0
      %455 = vmatprep.subr.mxu0 0.0
      %456 = vmatpush2.msra.mxu0 0.0
      %457 = vmatprep.subr.mxu0 0.0
      %458 = vmatpush2.msra.mxu0 0.0
      %459 = vmatprep.subr.mxu0 0.0
      %460 = vmatpush2.msra.mxu0 0.0
      %461 = vmatprep.subr.mxu0 0.0
      %462 = vmatpush2.msra.mxu0 0.0
      %463 = vmatprep.subr.mxu0 0.0
      %464 = vmatpush2.msra.mxu0 0.0
      %465 = vmatprep.subr.mxu0 0.0
      %466 = vmatpush2.msra.mxu0 0.0
      %467 = vmatprep.subr.mxu0 0.0
      %468 = vmatpush2.msra.mxu0 0.0
      %469 = vmatprep.subr.mxu0 0.0
      %470 = vmatpush2.msra.mxu0 0.0
      %471 = vmatprep.subr.mxu0 0.0
      %472 = vmatpush2.msra.mxu0 0.0
      %473 = vmatprep.subr.mxu0 0.0
      %474 = vmatpush2.msra.mxu0 0.0
      %475 = vmatprep.subr.mxu0 0.0
      %476 = vmatpush2.msra.mxu0 0.0
      %477 = vmatprep.mubr.f32.mxu0 0.0
      %478 = vmatmul.mubr.f32.gmra.mxu0 %v390
      %v479 = vpop.f32.mrf.mxu0
      %v480 = vadd.f32 0.0, %v479
      %v481 = vpop.f32.mrf.mxu0
      %482 = vmatprep.mubr.f32.mxu0 0.0
      %483 = vmatmul.mubr.f32.gmra.mxu0 %v393
      %v484 = vpop.f32.mrf.mxu0
      %v485 = vadd.f32 0.0, %v484
      %v486 = vpop.f32.mrf.mxu0
      %487 = vmatprep.mubr.f32.mxu0 0.0
      %488 = vmatmul.mubr.f32.gmra.mxu0 %v396
      %v489 = vpop.f32.mrf.mxu0
      %v490 = vadd.f32 0.0, %v489
      %v491 = vpop.f32.mrf.mxu0
      %492 = vmatprep.mubr.f32.mxu0 0.0
      %493 = vmatmul.mubr.f32.gmra.mxu0 %v399
      %v494 = vpop.f32.mrf.mxu0
      %v495 = vadd.f32 0.0, %v494
      %v496 = vpop.f32.mrf.mxu0
      %497 = vmatprep.mubr.f32.mxu0 0.0
      %498 = vmatmul.mubr.f32.gmra.mxu0 %v402
      %v499 = vpop.f32.mrf.mxu0
      %v500 = vadd.f32 0.0, %v499
      %v501 = vpop.f32.mrf.mxu0
      %502 = vmatprep.mubr.f32.mxu0 0.0
      %503 = vmatmul.mubr.f32.gmra.mxu0 %v405
      %v504 = vpop.f32.mrf.mxu0
      %v505 = vadd.f32 0.0, %v504
      %v506 = vpop.f32.mrf.mxu0
      %507 = vmatprep.mubr.f32.mxu0 0.0
      %508 = vmatmul.mubr.f32.gmra.mxu0 %v408
      %v509 = vpop.f32.mrf.mxu0
      %v510 = vadd.f32 0.0, %v509
      %v511 = vpop.f32.mrf.mxu0
      %512 = vmatprep.mubr.f32.mxu0 0.0
      %513 = vmatmul.mubr.f32.gmra.mxu0 %v411
      %v514 = vpop.f32.mrf.mxu0
      %v515 = vadd.f32 0.0, %v514
      %v516 = vpop.f32.mrf.mxu0
      %517 = vdwg.mxu0
      %v518 = vrcp.pop %v361
      %v519 = vrcp.pop %v364
      %v520 = vrcp.pop %v367
      %v521 = vrcp.pop %v370
      %v522 = vrcp.pop %v373
      %v523 = vrcp.pop %v376
      %v524 = vrcp.pop %v379
      %v525 = vrcp.pop %v382
      %v526 = vmul.f32 %v480, %v518
      %v527 = vmul.f32 %v485, %v519
      %v528 = vmul.f32 %v490, %v520
      %v529 = vmul.f32 %v495, %v521
      %v530 = vmul.f32 %v500, %v522
      %v531 = vmul.f32 %v505, %v523
      %v532 = vmul.f32 %v510, %v524
      %v533 = vmul.f32 %v515, %v525
      %534 = vrot.lane.b32.xlu0 %v164, 96
      %v535 = vpop.permute.xlu0 %534
      %536 = vrot.lane.b32.xlu0 %v165, 96
      %v537 = vpop.permute.xlu0 %536
      %538 = vrot.lane.b32.xlu0 %v166, 96
      %v539 = vpop.permute.xlu0 %538
      %540 = vrot.lane.b32.xlu0 %v167, 96
      %v541 = vpop.permute.xlu0 %540
      %542 = vrot.lane.b32.xlu0 %v168, 96
      %v543 = vpop.permute.xlu0 %542
      %544 = vrot.lane.b32.xlu0 %v169, 96
      %v545 = vpop.permute.xlu0 %544
      %546 = vrot.lane.b32.xlu0 %v170, 96
      %v547 = vpop.permute.xlu0 %546
      %548 = vrot.lane.b32.xlu0 %v171, 96
      %v549 = vpop.permute.xlu0 %548
      %550 = vrot.lane.b32.xlu0 %v172, 96
      %v551 = vpop.permute.xlu0 %550
      %552 = vrot.lane.b32.xlu0 %v173, 96
      %v553 = vpop.permute.xlu0 %552
      %v554 = vsel %vm174, %v535, 0
      %v556 = vsel %vm174, %v537, 0
      %v558 = vsel %vm174, %v539, 0
      %v560 = vsel %vm174, %v541, 0
      %v562 = vsel %vm174, %v543, 0
      %v564 = vsel %vm174, %v545, 0
      %v566 = vsel %vm174, %v547, 0
      %v568 = vsel %vm174, %v549, 0
      %v570 = vsel %vm174, %v551, 0
      %v572 = vsel %vm174, %v553, 0
      %574 = vmatprep.subr.mxu0 0.0
      %575 = vmatpush1.xpose.msra.mxu0 0.0
      %576 = vmatprep.subr.mxu0 0.0
      %577 = vmatpush1.xpose.msra.mxu0 0.0
      %578 = vmatprep.subr.mxu0 0.0
      %579 = vmatpush1.xpose.msra.mxu0 0.0
      %580 = vmatprep.subr.mxu0 0.0
      %581 = vmatpush1.xpose.msra.mxu0 0.0
      %582 = vmatprep.subr.mxu0 0.0
      %583 = vmatpush1.xpose.msra.mxu0 0.0
      %584 = vmatprep.subr.mxu0 0.0
      %585 = vmatpush1.xpose.msra.mxu0 0.0
      %586 = vmatprep.subr.mxu0 0.0
      %587 = vmatpush1.xpose.msra.mxu0 0.0
      %588 = vmatprep.subr.mxu0 0.0
      %589 = vmatpush1.xpose.msra.mxu0 0.0
      %590 = vmatprep.subr.mxu0 0.0
      %591 = vmatpush1.xpose.msra.mxu0 0.0
      %592 = vmatprep.subr.mxu0 0.0
      %593 = vmatpush1.xpose.msra.mxu0 0.0
      %594 = vmatprep.subr.mxu0 0.0
      %595 = vmatpush1.xpose.msra.mxu0 0.0
      %596 = vmatprep.subr.mxu0 0.0
      %597 = vmatpush1.xpose.msra.mxu0 0.0
      %598 = vmatprep.subr.mxu0 0.0
      %599 = vmatpush1.xpose.msra.mxu0 0.0
      %600 = vmatprep.subr.mxu0 0.0
      %601 = vmatpush1.xpose.msra.mxu0 0.0
      %602 = vmatprep.subr.mxu0 0.0
      %603 = vmatpush1.xpose.msra.mxu0 %v572
      %604 = vmatprep.subr.mxu0 0.0
      %605 = vmatpush1.xpose.msra.mxu0 %v570
      %606 = vmatprep.subr.mxu0 0.0
      %607 = vmatpush2.xpose.msra.mxu0 0.0
      %608 = vmatprep.subr.mxu0 0.0
      %609 = vmatpush2.xpose.msra.mxu0 0.0
      %610 = vmatprep.subr.mxu0 0.0
      %611 = vmatpush2.xpose.msra.mxu0 0.0
      %612 = vmatprep.subr.mxu0 0.0
      %613 = vmatpush2.xpose.msra.mxu0 0.0
      %614 = vmatprep.subr.mxu0 0.0
      %615 = vmatpush2.xpose.msra.mxu0 0.0
      %616 = vmatprep.subr.mxu0 0.0
      %617 = vmatpush2.xpose.msra.mxu0 0.0
      %618 = vmatprep.subr.mxu0 0.0
      %619 = vmatpush2.xpose.msra.mxu0 0.0
      %620 = vmatprep.subr.mxu0 0.0
      %621 = vmatpush2.xpose.msra.mxu0 0.0
      %622 = vmatprep.subr.mxu0 0.0
      %623 = vmatpush2.xpose.msra.mxu0 0.0
      %624 = vmatprep.subr.mxu0 0.0
      %625 = vmatpush2.xpose.msra.mxu0 0.0
      %626 = vmatprep.subr.mxu0 0.0
      %627 = vmatpush2.xpose.msra.mxu0 0.0
      %628 = vmatprep.subr.mxu0 0.0
      %629 = vmatpush2.xpose.msra.mxu0 0.0
      %630 = vmatprep.subr.mxu0 0.0
      %631 = vmatpush2.xpose.msra.mxu0 0.0
      %632 = vmatprep.subr.mxu0 0.0
      %633 = vmatpush2.xpose.msra.mxu0 0.0
      %634 = vmatprep.subr.mxu0 0.0
      %635 = vmatpush2.xpose.msra.mxu0 0.0
      %636 = vmatprep.subr.mxu0 0.0
      %637 = vmatpush2.xpose.msra.mxu0 0.0
      %638 = vmatprep.mubr.f32.mxu0 0.0
      %639 = vmatmul.mubr.f32.gmra.mxu0 %v554
      %v640 = vpop.f32.mrf.mxu0
      %v641 = vadd.f32 0.0, %v640
      %v642 = vpop.f32.mrf.mxu0
      %643 = vmatprep.mubr.f32.mxu0 0.0
      %644 = vmatmul.mubr.f32.gmra.mxu0 %v556
      %v645 = vpop.f32.mrf.mxu0
      %v646 = vadd.f32 0.0, %v645
      %v647 = vpop.f32.mrf.mxu0
      %648 = vmatprep.mubr.f32.mxu0 0.0
      %649 = vmatmul.mubr.f32.gmra.mxu0 %v558
      %v650 = vpop.f32.mrf.mxu0
      %v651 = vadd.f32 0.0, %v650
      %v652 = vpop.f32.mrf.mxu0
      %653 = vmatprep.mubr.f32.mxu0 0.0
      %654 = vmatmul.mubr.f32.gmra.mxu0 %v560
      %v655 = vpop.f32.mrf.mxu0
      %v656 = vadd.f32 0.0, %v655
      %v657 = vpop.f32.mrf.mxu0
      %658 = vmatprep.mubr.f32.mxu0 0.0
      %659 = vmatmul.mubr.f32.gmra.mxu0 %v562
      %v660 = vpop.f32.mrf.mxu0
      %v661 = vadd.f32 0.0, %v660
      %v662 = vpop.f32.mrf.mxu0
      %663 = vmatprep.mubr.f32.mxu0 0.0
      %664 = vmatmul.mubr.f32.gmra.mxu0 %v564
      %v665 = vpop.f32.mrf.mxu0
      %v666 = vadd.f32 0.0, %v665
      %v667 = vpop.f32.mrf.mxu0
      %668 = vmatprep.mubr.f32.mxu0 0.0
      %669 = vmatmul.mubr.f32.gmra.mxu0 %v566
      %v670 = vpop.f32.mrf.mxu0
      %v671 = vadd.f32 0.0, %v670
      %v672 = vpop.f32.mrf.mxu0
      %673 = vmatprep.mubr.f32.mxu0 0.0
      %674 = vmatmul.mubr.f32.gmra.mxu0 %v568
      %v675 = vpop.f32.mrf.mxu0
      %v676 = vadd.f32 0.0, %v675
      %v677 = vpop.f32.mrf.mxu0
      %678 = vdwg.mxu0
      %v679 = vsel %vm310, %v641, -inf
      %680 = vmax.xlane.f32.xlu0 %v679
      %v681 = vpop.xlane.xlu0 %680
      %v682 = vsel %vm310, %v646, -inf
      %683 = vmax.xlane.f32.xlu0 %v682
      %v684 = vpop.xlane.xlu0 %683
      %v685 = vsel %vm310, %v651, -inf
      %686 = vmax.xlane.f32.xlu0 %v685
      %v687 = vpop.xlane.xlu0 %686
      %v688 = vsel %vm310, %v656, -inf
      %689 = vmax.xlane.f32.xlu0 %v688
      %v690 = vpop.xlane.xlu0 %689
      %v691 = vsel %vm310, %v661, -inf
      %692 = vmax.xlane.f32.xlu0 %v691
      %v693 = vpop.xlane.xlu0 %692
      %v694 = vsel %vm310, %v666, -inf
      %695 = vmax.xlane.f32.xlu0 %v694
      %v696 = vpop.xlane.xlu0 %695
      %v697 = vsel %vm310, %v671, -inf
      %698 = vmax.xlane.f32.xlu0 %v697
      %v699 = vpop.xlane.xlu0 %698
      %v700 = vsel %vm310, %v676, -inf
      %701 = vmax.xlane.f32.xlu0 %v700
      %v702 = vpop.xlane.xlu0 %701
      %v703 = vsub.f32 %v641, %v681
      %v704 = vsub.f32 %v646, %v684
      %v705 = vsub.f32 %v651, %v687
      %v706 = vsub.f32 %v656, %v690
      %v707 = vsub.f32 %v661, %v693
      %v708 = vsub.f32 %v666, %v696
      %v709 = vsub.f32 %v671, %v699
      %v710 = vsub.f32 %v676, %v702
      %v711 = vmul.f32 %v703, 1.442695
      %v712 = vpow.pop %v711
      %v713 = vmul.f32 %v704, 1.442695
      %v714 = vpow.pop %v713
      %v715 = vmul.f32 %v705, 1.442695
      %v716 = vpow.pop %v715
      %v717 = vmul.f32 %v706, 1.442695
      %v718 = vpow.pop %v717
      %v719 = vmul.f32 %v707, 1.442695
      %v720 = vpow.pop %v719
      %v721 = vmul.f32 %v708, 1.442695
      %v722 = vpow.pop %v721
      %v723 = vmul.f32 %v709, 1.442695
      %v724 = vpow.pop %v723
      %v725 = vmul.f32 %v710, 1.442695
      %v726 = vpow.pop %v725
      %v727 = vsel %vm310, %v712, 0.0
      %728 = vadd.xlane.f32.xlu0 %v727
      %v729 = vpop.xlane.xlu0 %728
      %v730 = vsel %vm310, %v714, 0.0
      %731 = vadd.xlane.f32.xlu0 %v730
      %v732 = vpop.xlane.xlu0 %731
      %v733 = vsel %vm310, %v716, 0.0
      %734 = vadd.xlane.f32.xlu0 %v733
      %v735 = vpop.xlane.xlu0 %734
      %v736 = vsel %vm310, %v718, 0.0
      %737 = vadd.xlane.f32.xlu0 %v736
      %v738 = vpop.xlane.xlu0 %737
      %v739 = vsel %vm310, %v720, 0.0
      %740 = vadd.xlane.f32.xlu0 %v739
      %v741 = vpop.xlane.xlu0 %740
      %v742 = vsel %vm310, %v722, 0.0
      %743 = vadd.xlane.f32.xlu0 %v742
      %v744 = vpop.xlane.xlu0 %743
      %v745 = vsel %vm310, %v724, 0.0
      %746 = vadd.xlane.f32.xlu0 %v745
      %v747 = vpop.xlane.xlu0 %746
      %v748 = vsel %vm310, %v726, 0.0
      %749 = vadd.xlane.f32.xlu0 %v748
      %v750 = vpop.xlane.xlu0 %749
      %751 = vrot.lane.b32.xlu0 %v172, 32
      %v752 = vpop.permute.xlu0 %751
      %753 = vrot.lane.b32.xlu0 %v173, 32
      %v754 = vpop.permute.xlu0 %753
      %v758 = vsel %vm310, %v712, 0
      %v761 = vsel %vm310, %v714, 0
      %v764 = vsel %vm310, %v716, 0
      %v767 = vsel %vm310, %v718, 0
      %v770 = vsel %vm310, %v720, 0
      %v773 = vsel %vm310, %v722, 0
      %v776 = vsel %vm310, %v724, 0
      %v779 = vsel %vm310, %v726, 0
      %781 = vmatprep.subr.mxu0 0.0
      %782 = vmatpush1.msra.mxu0 0.0
      %783 = vmatprep.subr.mxu0 0.0
      %784 = vmatpush1.msra.mxu0 0.0
      %785 = vmatprep.subr.mxu0 0.0
      %786 = vmatpush1.msra.mxu0 0.0
      %787 = vmatprep.subr.mxu0 0.0
      %788 = vmatpush1.msra.mxu0 0.0
      %789 = vmatprep.subr.mxu0 0.0
      %790 = vmatpush1.msra.mxu0 0.0
      %791 = vmatprep.subr.mxu0 0.0
      %792 = vmatpush1.msra.mxu0 0.0
      %793 = vmatprep.subr.mxu0 0.0
      %794 = vmatpush1.msra.mxu0 0.0
      %795 = vmatprep.subr.mxu0 0.0
      %796 = vmatpush1.msra.mxu0 0.0
      %797 = vmatprep.subr.mxu0 0.0
      %798 = vmatpush1.msra.mxu0 0.0
      %799 = vmatprep.subr.mxu0 0.0
      %800 = vmatpush1.msra.mxu0 0.0
      %801 = vmatprep.subr.mxu0 0.0
      %802 = vmatpush1.msra.mxu0 0.0
      %803 = vmatprep.subr.mxu0 0.0
      %804 = vmatpush1.msra.mxu0 0.0
      %805 = vmatprep.subr.mxu0 0.0
      %806 = vmatpush1.msra.mxu0 0.0
      %807 = vmatprep.subr.mxu0 0.0
      %808 = vmatpush1.msra.mxu0 0.0
      %809 = vmatprep.subr.mxu0 0.0
      %810 = vmatpush1.msra.mxu0 %v754
      %811 = vmatprep.subr.mxu0 0.0
      %812 = vmatpush1.msra.mxu0 %v752
      %813 = vmatprep.subr.mxu0 0.0
      %814 = vmatpush2.msra.mxu0 0.0
      %815 = vmatprep.subr.mxu0 0.0
      %816 = vmatpush2.msra.mxu0 0.0
      %817 = vmatprep.subr.mxu0 0.0
      %818 = vmatpush2.msra.mxu0 0.0
      %819 = vmatprep.subr.mxu0 0.0
      %820 = vmatpush2.msra.mxu0 0.0
      %821 = vmatprep.subr.mxu0 0.0
      %822 = vmatpush2.msra.mxu0 0.0
      %823 = vmatprep.subr.mxu0 0.0
      %824 = vmatpush2.msra.mxu0 0.0
      %825 = vmatprep.subr.mxu0 0.0
      %826 = vmatpush2.msra.mxu0 0.0
      %827 = vmatprep.subr.mxu0 0.0
      %828 = vmatpush2.msra.mxu0 0.0
      %829 = vmatprep.subr.mxu0 0.0
      %830 = vmatpush2.msra.mxu0 0.0
      %831 = vmatprep.subr.mxu0 0.0
      %832 = vmatpush2.msra.mxu0 0.0
      %833 = vmatprep.subr.mxu0 0.0
      %834 = vmatpush2.msra.mxu0 0.0
      %835 = vmatprep.subr.mxu0 0.0
      %836 = vmatpush2.msra.mxu0 0.0
      %837 = vmatprep.subr.mxu0 0.0
      %838 = vmatpush2.msra.mxu0 0.0
      %839 = vmatprep.subr.mxu0 0.0
      %840 = vmatpush2.msra.mxu0 0.0
      %841 = vmatprep.subr.mxu0 0.0
      %842 = vmatpush2.msra.mxu0 0.0
      %843 = vmatprep.subr.mxu0 0.0
      %844 = vmatpush2.msra.mxu0 0.0
      %845 = vmatprep.mubr.f32.mxu0 0.0
      %846 = vmatmul.mubr.f32.gmra.mxu0 %v758
      %v847 = vpop.f32.mrf.mxu0
      %v848 = vadd.f32 0.0, %v847
      %v849 = vpop.f32.mrf.mxu0
      %850 = vmatprep.mubr.f32.mxu0 0.0
      %851 = vmatmul.mubr.f32.gmra.mxu0 %v761
      %v852 = vpop.f32.mrf.mxu0
      %v853 = vadd.f32 0.0, %v852
      %v854 = vpop.f32.mrf.mxu0
      %855 = vmatprep.mubr.f32.mxu0 0.0
      %856 = vmatmul.mubr.f32.gmra.mxu0 %v764
      %v857 = vpop.f32.mrf.mxu0
      %v858 = vadd.f32 0.0, %v857
      %v859 = vpop.f32.mrf.mxu0
      %860 = vmatprep.mubr.f32.mxu0 0.0
      %861 = vmatmul.mubr.f32.gmra.mxu0 %v767
      %v862 = vpop.f32.mrf.mxu0
      %v863 = vadd.f32 0.0, %v862
      %v864 = vpop.f32.mrf.mxu0
      %865 = vmatprep.mubr.f32.mxu0 0.0
      %866 = vmatmul.mubr.f32.gmra.mxu0 %v770
      %v867 = vpop.f32.mrf.mxu0
      %v868 = vadd.f32 0.0, %v867
      %v869 = vpop.f32.mrf.mxu0
      %870 = vmatprep.mubr.f32.mxu0 0.0
      %871 = vmatmul.mubr.f32.gmra.mxu0 %v773
      %v872 = vpop.f32.mrf.mxu0
      %v873 = vadd.f32 0.0, %v872
      %v874 = vpop.f32.mrf.mxu0
      %875 = vmatprep.mubr.f32.mxu0 0.0
      %876 = vmatmul.mubr.f32.gmra.mxu0 %v776
      %v877 = vpop.f32.mrf.mxu0
      %v878 = vadd.f32 0.0, %v877
      %v879 = vpop.f32.mrf.mxu0
      %880 = vmatprep.mubr.f32.mxu0 0.0
      %881 = vmatmul.mubr.f32.gmra.mxu0 %v779
      %v882 = vpop.f32.mrf.mxu0
      %v883 = vadd.f32 0.0, %v882
      %v884 = vpop.f32.mrf.mxu0
      %885 = vdwg.mxu0
      %v886 = vrcp.pop %v729
      %v887 = vrcp.pop %v732
      %v888 = vrcp.pop %v735
      %v889 = vrcp.pop %v738
      %v890 = vrcp.pop %v741
      %v891 = vrcp.pop %v744
      %v892 = vrcp.pop %v747
      %v893 = vrcp.pop %v750
      %v894 = vmul.f32 %v848, %v886
      %v895 = vmul.f32 %v853, %v887
      %v896 = vmul.f32 %v858, %v888
      %v897 = vmul.f32 %v863, %v889
      %v898 = vmul.f32 %v868, %v890
      %v899 = vmul.f32 %v873, %v891
      %v900 = vmul.f32 %v878, %v892
      %v901 = vmul.f32 %v883, %v893
      %910 = vrot.lane.b32.xlu0 %v894, 32
      %v911 = vpop.permute.xlu0 %910
      %912 = vrot.lane.b32.xlu0 %v895, 32
      %v913 = vpop.permute.xlu0 %912
      %914 = vrot.lane.b32.xlu0 %v896, 32
      %v915 = vpop.permute.xlu0 %914
      %916 = vrot.lane.b32.xlu0 %v897, 32
      %v917 = vpop.permute.xlu0 %916
      %918 = vrot.lane.b32.xlu0 %v898, 32
      %v919 = vpop.permute.xlu0 %918
      %920 = vrot.lane.b32.xlu0 %v899, 32
      %v921 = vpop.permute.xlu0 %920
      %922 = vrot.lane.b32.xlu0 %v900, 32
      %v923 = vpop.permute.xlu0 %922
      %924 = vrot.lane.b32.xlu0 %v901, 32
      %v925 = vpop.permute.xlu0 %924
      %v934 = vsel %vm174, %v526, %v911
      %v935 = vsel %vm174, %v527, %v913
      %v936 = vsel %vm174, %v528, %v915
      %v937 = vsel %vm174, %v529, %v917
      %v938 = vsel %vm174, %v530, %v919
      %v939 = vsel %vm174, %v531, %v921
      %v940 = vsel %vm174, %v532, %v923
      %v941 = vsel %vm174, %v533, %v925
      %vm942 = vcmask 523264
      %943 = vst.msk [vmem:[%s163] sm:$0xff] %vm942, %v934
      %944 = vst.msk [vmem:[%s163 + $0x8] sm:$0xff] %vm942, %v935
      %945 = vst.msk [vmem:[%s163 + $0x10] sm:$0xff] %vm942, %v936
      %946 = vst.msk [vmem:[%s163 + $0x18] sm:$0xff] %vm942, %v937
      %947 = vst.msk [vmem:[%s163 + $0x20] sm:$0xff] %vm942, %v938
      %948 = vst.msk [vmem:[%s163 + $0x28] sm:$0xff] %vm942, %v939
      %949 = vst.msk [vmem:[%s163 + $0x30] sm:$0xff] %vm942, %v940
      %950 = vst.msk [vmem:[%s163 + $0x38] sm:$0xff] %vm942, %v941
      %p951 = scmp.lt.s32.totalorder %s13, 1
      %s952 = scalar_select %p951, %s13, 1
      %s953 = smul.addr %s952, 8
      %s954 = smul.addr %s953, 8
      %s955 = scalar_lea.vmem %s2, %s954
      // Predicated region
      $region29: #{efficient_attention_forward.6} parent=27 // pred_check
        %p956 = pneg %p83
      $region30: #{efficient_attention_forward.6} parent=27 // pred_check_branch
        %958 = sbr.rel (%p956) target = $region32
      $region31: #{efficient_attention_forward.6} parent=27 // pred_region
        _
      $region32: #{efficient_attention_forward.6} parent=27 // pred_fallthru
        _
    $region28: #{efficient_attention_forward.6} parent=5 // pred_fallthru
      _
    %p959 = scmp.le.s32.totalorder 2, %s8
    // Predicated region
    $region33: #{efficient_attention_forward.6} parent=5 // pred_check
      %p960 = pneg %p959
    $region34: #{efficient_attention_forward.6} parent=5 // pred_check_branch
      %962 = sbr.rel (%p960) target = $region36
    $region35: #{efficient_attention_forward.6} parent=5 // pred_region
      %s963 = ssub.s32 %s8, 2
      // Predicated region
      $region37: #{efficient_attention_forward.6} parent=35 // pred_check
        %p964 = pneg %p89
      $region38: #{efficient_attention_forward.6} parent=35 // pred_check_branch
        %966 = sbr.rel (%p964) target = $region40
      $region39: #{efficient_attention_forward.6} parent=35 // pred_region
        %p967 = scmp.lt.s32.totalorder %s14, 1
        %s968 = scalar_select %p967, %s14, 1
        %s969 = smul.addr %s968, 8
        %s970 = smul.addr %s969, 8
        %s971 = scalar_lea.vmem %s2, %s970
      $region40: #{efficient_attention_forward.6} parent=35 // pred_fallthru
        _
    $region36: #{efficient_attention_forward.6} parent=5 // pred_fallthru
      _
  $region6: #{efficient_attention_forward.6} parent=0 // loop_footer
    %s12 = sadd.s32 1, %s8
  $region7: #{efficient_attention_forward.6} parent=0 // loop_footer_branch
    %7 = sbr.rel target = $region3
  $region8: #{efficient_attention_forward.6} parent=0 // loop_exit
    _

</llo_original>
